<compile_context>
chip_gen: v7x
topology: tpu7x:2x2x1
jax: 0.10.0
libtpu: 0.0.40
codegen_flags: <defaults>
</compile_context>

<pallas_src>
import math
import functools

import jax
import jax.numpy as jnp
from jax import lax
from jax.experimental import pallas as pl
from jax.experimental.pallas import tpu as pltpu

# Operand dtype fed to the MXU matmuls. Default f32 preserves reference
# numerics; on v6e/v7x this can be flipped to jnp.bfloat16 (accumulation stays
# f32 via preferred_element_type; mask/softmax/LayerNorm math stays f32).
_MXU_DTYPE = jnp.float32
_NEG_INF = -1e10
_LN_EPS = 1e-5


def _round_up(x, m):
    return ((x + m - 1) // m) * m


def _pick_tile(dim, pref, align):
    """Largest tile <= pref that is a multiple of `align` and divides `dim`;
    falls back to the full extent (always a legal TPU block)."""
    if dim <= pref:
        return dim
    t = (pref // align) * align
    while t >= align:
        if dim % t == 0:
            return t
        t -= align
    return dim


# ----------------------------------------------------------------------------
# Fused multi-head attention sub-layer kernel
#   out = LayerNorm(OutProj(MHA(x_q, x_kv, mask_bias)) + x_q)
# ----------------------------------------------------------------------------
def _mha_kernel(xq_ref, xkv_ref, bias_ref, wq_ref, bq_ref, wkv_ref, bkv_ref,
                wo_ref, bo_ref, g_ref, be_ref, o_ref, *maybe_attn,
                n_heads, inv_scale, eps, emit_attn):
    xq = xq_ref[0].astype(jnp.float32)       # [Lq, D]
    xkv = xkv_ref[0]                         # [Lk, D]
    bias = bias_ref[0]                       # [Lq, Lk] additive (0 / -1e10)

    q = jnp.dot(xq.astype(_MXU_DTYPE), wq_ref[...].astype(_MXU_DTYPE),
                preferred_element_type=jnp.float32) + bq_ref[...]
    kv = jnp.dot(xkv.astype(_MXU_DTYPE), wkv_ref[...].astype(_MXU_DTYPE),
                 preferred_element_type=jnp.float32) + bkv_ref[...]

    Lq, D = q.shape
    hd = D // n_heads
    k = kv[:, :D]
    v = kv[:, D:]
    wo = wo_ref[...]

    o = jnp.zeros((Lq, D), jnp.float32)
    for h in range(n_heads):                 # static unroll over heads
        lo, hi = h * hd, (h + 1) * hd
        q_h = q[:, lo:hi]
        k_h = k[:, lo:hi]
        v_h = v[:, lo:hi]
        e = jnp.dot(q_h, k_h.T, preferred_element_type=jnp.float32) * inv_scale + bias
        e = e - jnp.max(e, axis=-1, keepdims=True)
        p = jnp.exp(e)
        attn = p * pl.reciprocal(jnp.sum(p, axis=-1, keepdims=True), approx=True)
        if emit_attn:
            maybe_attn[0][0, h] = attn.astype(maybe_attn[0].dtype)
        ctx = jnp.dot(attn.astype(_MXU_DTYPE), v_h.astype(_MXU_DTYPE),
                      preferred_element_type=jnp.float32)          # [Lq, hd]
        # fold head h straight into the output projection (no concat needed)
        o = o + jnp.dot(ctx.astype(_MXU_DTYPE), wo[lo:hi, :].astype(_MXU_DTYPE),
                        preferred_element_type=jnp.float32)
    o = o + bo_ref[...]

    # fused residual-add + LayerNorm epilogue (all f32)
    y = o + xq
    mean = jnp.mean(y, axis=-1, keepdims=True)
    var = jnp.mean(jnp.square(y - mean), axis=-1, keepdims=True)
    yn = (y - mean) * lax.rsqrt(var + eps)
    o_ref[0] = (yn * g_ref[...] + be_ref[...]).astype(o_ref.dtype)


def mha_block(x_q, x_kv, bias, p, ln_g, ln_b, n_heads, emit_attn=False):
    B, Lq, D = x_q.shape
    Lk = x_kv.shape[1]
    hd = D // n_heads
    inv_scale = 1.0 / math.sqrt(hd)

    wkv = jnp.concatenate([p["wk"], p["wv"]], axis=1)                 # [D, 2D]
    bkv = jnp.concatenate([p["bk"], p["bv"]], axis=0).reshape(1, 2 * D)

    kernel = functools.partial(_mha_kernel, n_heads=n_heads, inv_scale=inv_scale,
                               eps=_LN_EPS, emit_attn=emit_attn)

    out_shape = jax.ShapeDtypeStruct((B, Lq, D), x_q.dtype)
    out_spec = pl.BlockSpec((1, Lq, D), lambda b: (b, 0, 0))
    if emit_attn:
        out_shape = (out_shape,
                     jax.ShapeDtypeStruct((B, n_heads, Lq, Lk), jnp.float32))
        out_spec = (out_spec,
                    pl.BlockSpec((1, n_heads, Lq, Lk), lambda b: (b, 0, 0, 0)))

    res = pl.pallas_call(
        kernel,
        out_shape=out_shape,
        grid=(B,),
        in_specs=[
            pl.BlockSpec((1, Lq, D), lambda b: (b, 0, 0)),     # x_q
            pl.BlockSpec((1, Lk, D), lambda b: (b, 0, 0)),     # x_kv
            pl.BlockSpec((1, Lq, Lk), lambda b: (b, 0, 0)),    # additive mask bias
            pl.BlockSpec((D, D), lambda b: (0, 0)),            # wq
            pl.BlockSpec((1, D), lambda b: (0, 0)),            # bq
            pl.BlockSpec((D, 2 * D), lambda b: (0, 0)),        # wkv (fused K|V)
            pl.BlockSpec((1, 2 * D), lambda b: (0, 0)),        # bkv
            pl.BlockSpec((D, D), lambda b: (0, 0)),            # wo
            pl.BlockSpec((1, D), lambda b: (0, 0)),            # bo
            pl.BlockSpec((1, D), lambda b: (0, 0)),            # ln gamma
            pl.BlockSpec((1, D), lambda b: (0, 0)),            # ln beta
        ],
        out_specs=out_spec,
        compiler_params=pltpu.CompilerParams(
            dimension_semantics=("parallel",),
            vmem_limit_bytes=32 * 1024 * 1024),
    )(x_q, x_kv, bias, p["wq"], p["bq"].reshape(1, D), wkv, bkv,
      p["wo"], p["bo"].reshape(1, D), ln_g.reshape(1, D), ln_b.reshape(1, D))

    if emit_attn:
        return res[0], res[1]
    return res, None


# ----------------------------------------------------------------------------
# Fused position-wise FFN sub-layer kernel
#   out = LayerNorm(relu(x @ w1 + b1) @ w2 + b2 + x)
# ----------------------------------------------------------------------------
def _ffn_kernel(x_ref, w1_ref, b1_ref, w2_ref, b2_ref, g_ref, be_ref, o_ref, *, eps):
    x = x_ref[...].astype(jnp.float32)                               # [tm, D]
    h = jnp.dot(x.astype(_MXU_DTYPE), w1_ref[...].astype(_MXU_DTYPE),
                preferred_element_type=jnp.float32) + b1_ref[...]
    h = jnp.maximum(h, 0.0)
    y = jnp.dot(h.astype(_MXU_DTYPE), w2_ref[...].astype(_MXU_DTYPE),
                preferred_element_type=jnp.float32) + b2_ref[...]
    y = y + x
    mean = jnp.mean(y, axis=-1, keepdims=True)
    var = jnp.mean(jnp.square(y - mean), axis=-1, keepdims=True)
    yn = (y - mean) * lax.rsqrt(var + eps)
    o_ref[...] = (yn * g_ref[...] + be_ref[...]).astype(o_ref.dtype)


def ffn_block(x, w1, b1, w2, b2, ln_g, ln_b):
    B, L, D = x.shape
    PF = w1.shape[1]
    M = B * L
    tm = _pick_tile(M, 256, 8)
    out = pl.pallas_call(
        functools.partial(_ffn_kernel, eps=_LN_EPS),
        out_shape=jax.ShapeDtypeStruct((M, D), x.dtype),
        grid=(M // tm,),
        in_specs=[
            pl.BlockSpec((tm, D), lambda i: (i, 0)),
            pl.BlockSpec((D, PF), lambda i: (0, 0)),
            pl.BlockSpec((1, PF), lambda i: (0, 0)),
            pl.BlockSpec((PF, D), lambda i: (0, 0)),
            pl.BlockSpec((1, D), lambda i: (0, 0)),
            pl.BlockSpec((1, D), lambda i: (0, 0)),
            pl.BlockSpec((1, D), lambda i: (0, 0)),
        ],
        out_specs=pl.BlockSpec((tm, D), lambda i: (i, 0)),
        compiler_params=pltpu.CompilerParams(
            dimension_semantics=("parallel",),
            vmem_limit_bytes=32 * 1024 * 1024),
    )(x.reshape(M, D), w1, b1.reshape(1, PF), w2, b2.reshape(1, D),
      ln_g.reshape(1, D), ln_b.reshape(1, D))
    return out.reshape(B, L, D)


# ----------------------------------------------------------------------------
# Tiled linear (used for the final vocab projection) with a lane-dense
# padded-N output slab and an f32 VMEM accumulator over K tiles.
# ----------------------------------------------------------------------------
def _linear_kernel(x_ref, w_ref, b_ref, o_ref, acc_ref):
    @pl.when(pl.program_id(2) == 0)
    def _():
        acc_ref[...] = jnp.zeros_like(acc_ref)

    acc_ref[...] += jnp.dot(x_ref[...].astype(_MXU_DTYPE),
                            w_ref[...].astype(_MXU_DTYPE),
                            preferred_element_type=jnp.float32)

    @pl.when(pl.program_id(2) == pl.num_programs(2) - 1)
    def _():
        o_ref[...] = (acc_ref[...] + b_ref[...]).astype(o_ref.dtype)


def linear(x, w, b):
    orig = x.shape
    K = orig[-1]
    M = int(math.prod(orig[:-1]))
    N = w.shape[1]
    Np = _round_up(N, 128)
    if Np != N:                     # lane-dense output; sliced back below
        w = jnp.pad(w, ((0, 0), (0, Np - N)))
        b = jnp.pad(b, (0, Np - N))
    tm = _pick_tile(M, 256, 8)
    tn = _pick_tile(Np, 256, 128)
    tk = _pick_tile(K, 512, 128)
    out = pl.pallas_call(
        _linear_kernel,
        out_shape=jax.ShapeDtypeStruct((M, Np), x.dtype),
        grid=(M // tm, Np // tn, K // tk),
        in_specs=[
            pl.BlockSpec((tm, tk), lambda i, j, k: (i, k)),
            pl.BlockSpec((tk, tn), lambda i, j, k: (k, j)),
            pl.BlockSpec((1, tn), lambda i, j, k: (0, j)),
        ],
        out_specs=pl.BlockSpec((tm, tn), lambda i, j, k: (i, j)),
        scratch_shapes=[pltpu.VMEM((tm, tn), jnp.float32)],
        compiler_params=pltpu.CompilerParams(
            dimension_semantics=("parallel", "parallel", "arbitrary"),
            vmem_limit_bytes=32 * 1024 * 1024),
    )(x.reshape(M, K), w, b.reshape(1, Np))
    if Np != N:
        out = out[:, :N]
    return out.reshape(orig[:-1] + (N,))


# ----------------------------------------------------------------------------
# Encoder / Decoder / Seq2Seq forward
# ----------------------------------------------------------------------------
def encoder_forward(src, src_bias, params, n_heads):
    B, S = src.shape
    D = params["tok_emb"].shape[1]
    x = jnp.take(params["tok_emb"], src, axis=0) * math.sqrt(D) \
        + params["pos_emb"][None, :S, :]
    for lp in params["layers"]:
        x, _ = mha_block(x, x, src_bias, lp["self_attn"], lp["ln1_g"], lp["ln1_b"], n_heads)
        x = ffn_block(x, lp["ff_w1"], lp["ff_b1"], lp["ff_w2"], lp["ff_b2"],
                      lp["ln2_g"], lp["ln2_b"])
    return x


def decoder_forward(trg, enc_src, trg_bias, cross_bias, params, n_heads):
    B, T = trg.shape
    D = params["tok_emb"].shape[1]
    x = jnp.take(params["tok_emb"], trg, axis=0) * math.sqrt(D) \
        + params["pos_emb"][None, :T, :]
    attention = None
    n_layers = len(params["layers"])
    for li, lp in enumerate(params["layers"]):
        x, _ = mha_block(x, x, trg_bias, lp["self_attn"], lp["ln1_g"], lp["ln1_b"], n_heads)
        # Only the last layer's cross-attention probabilities are returned by the
        # model, so only that call writes them back to HBM.
        emit = (li == n_layers - 1)
        x, attn = mha_block(x, enc_src, cross_bias, lp["enc_attn"],
                            lp["ln2_g"], lp["ln2_b"], n_heads, emit_attn=emit)
        if emit:
            attention = attn
        x = ffn_block(x, lp["ff_w1"], lp["ff_b1"], lp["ff_w2"], lp["ff_b2"],
                      lp["ln3_g"], lp["ln3_b"])
    output = linear(x, params["fc_out_w"], params["fc_out_b"])
    return output, attention


def seq2seq_forward(src, trg, params, src_pad_idx, trg_pad_idx, n_heads):
    B, S = src.shape
    T = trg.shape[1]
    # Additive attention biases (0 = keep, -1e10 = masked), built once and
    # reused by every layer/head — matches masked_fill(mask == 0, -1e10).
    src_keep = (src != src_pad_idx)                                   # [B, S]
    trg_keep = (trg != trg_pad_idx)                                   # [B, T]
    causal = jnp.tril(jnp.ones((T, T), jnp.float32)).astype(jnp.bool_)
    src_self_bias = jnp.broadcast_to(
        jnp.where(src_keep[:, None, :], 0.0, _NEG_INF), (B, S, S)).astype(jnp.float32)
    cross_bias = jnp.broadcast_to(
        jnp.where(src_keep[:, None, :], 0.0, _NEG_INF), (B, T, S)).astype(jnp.float32)
    trg_self_bias = jnp.where(trg_keep[:, None, :] & causal[None, :, :],
                              0.0, _NEG_INF).astype(jnp.float32)

    enc_src = encoder_forward(src, src_self_bias, params["encoder"], n_heads)
    output, attention = decoder_forward(trg, enc_src, trg_self_bias, cross_bias,
                                        params["decoder"], n_heads)
    return output, attention


# ----------------------------------------------------------------------------
# Deterministic parameter construction
# ----------------------------------------------------------------------------
def _mha_params(key, d):
    ks = jax.random.split(key, 4)
    std = 1.0 / math.sqrt(d)
    return {
        "wq": jax.random.normal(ks[0], (d, d), jnp.float32) * std, "bq": jnp.zeros((d,), jnp.float32),
        "wk": jax.random.normal(ks[1], (d, d), jnp.float32) * std, "bk": jnp.zeros((d,), jnp.float32),
        "wv": jax.random.normal(ks[2], (d, d), jnp.float32) * std, "bv": jnp.zeros((d,), jnp.float32),
        "wo": jax.random.normal(ks[3], (d, d), jnp.float32) * std, "bo": jnp.zeros((d,), jnp.float32),
    }


def _layer_params(key, d, pf, is_decoder):
    ks = jax.random.split(key, 4)
    lp = {
        "self_attn": _mha_params(ks[0], d),
        "ln1_g": jnp.ones((d,), jnp.float32), "ln1_b": jnp.zeros((d,), jnp.float32),
        "ff_w1": jax.random.normal(ks[1], (d, pf), jnp.float32) / math.sqrt(d),
        "ff_b1": jnp.zeros((pf,), jnp.float32),
        "ff_w2": jax.random.normal(ks[2], (pf, d), jnp.float32) / math.sqrt(pf),
        "ff_b2": jnp.zeros((d,), jnp.float32),
        "ln2_g": jnp.ones((d,), jnp.float32), "ln2_b": jnp.zeros((d,), jnp.float32),
    }
    if is_decoder:
        lp["enc_attn"] = _mha_params(ks[3], d)
        lp["ln3_g"] = jnp.ones((d,), jnp.float32)
        lp["ln3_b"] = jnp.zeros((d,), jnp.float32)
    return lp


def make_params(key, src_vocab, trg_vocab, d, pf, n_layers, max_len):
    k_enc, k_dec = jax.random.split(key)
    ke = jax.random.split(k_enc, n_layers + 2)
    kd = jax.random.split(k_dec, n_layers + 3)
    enc = {
        "tok_emb": jax.random.normal(ke[0], (src_vocab, d), jnp.float32) * 0.02,
        "pos_emb": jax.random.normal(ke[1], (max_len, d), jnp.float32) * 0.02,
        "layers": [_layer_params(ke[2 + i], d, pf, False) for i in range(n_layers)],
    }
    dec = {
        "tok_emb": jax.random.normal(kd[0], (trg_vocab, d), jnp.float32) * 0.02,
        "pos_emb": jax.random.normal(kd[1], (max_len, d), jnp.float32) * 0.02,
        "layers": [_layer_params(kd[2 + i], d, pf, True) for i in range(n_layers)],
        "fc_out_w": jax.random.normal(kd[-1], (d, trg_vocab), jnp.float32) / math.sqrt(d),
        "fc_out_b": jnp.zeros((trg_vocab,), jnp.float32),
    }
    return {"encoder": enc, "decoder": dec}


# ----------------------------------------------------------------------------
if __name__ == "__main__":
    # Small config consistent with the tutorial Seq2Seq transformer.
    SRC_VOCAB, TRG_VOCAB = 50, 60
    HID_DIM, N_HEADS, PF_DIM, N_LAYERS, MAX_LEN = 32, 4, 64, 2, 100
    SRC_PAD_IDX, TRG_PAD_IDX = 0, 0
    B, S, T = 2, 8, 8

    key = jax.random.PRNGKey(0)
    k_par, k_src, k_trg = jax.random.split(key, 3)
    params = make_params(k_par, SRC_VOCAB, TRG_VOCAB, HID_DIM, PF_DIM, N_LAYERS, MAX_LEN)

    src = jax.random.randint(k_src, (B, S), 1, SRC_VOCAB, dtype=jnp.int32)
    trg = jax.random.randint(k_trg, (B, T), 1, TRG_VOCAB, dtype=jnp.int32)
    # add some padding tokens (but never an all-pad row)
    src = src.at[:, -2:].set(SRC_PAD_IDX)
    trg = trg.at[:, -1:].set(TRG_PAD_IDX)

    output, attention = seq2seq_forward(src, trg, params, SRC_PAD_IDX, TRG_PAD_IDX, N_HEADS)
    jax.block_until_ready(output)
    jax.block_until_ready(attention)

    assert output.shape == (B, T, TRG_VOCAB), output.shape
    assert attention.shape == (B, N_HEADS, T, S), attention.shape
    assert bool(jnp.all(jnp.isfinite(output))) and bool(jnp.all(jnp.isfinite(attention)))
    print("KERNEL_OK")
</pallas_src>

<mosaic_0001>
module attributes {stable_mosaic.version = 11 : i64} {
  func.func @_mha_kernel(%arg0: i32, %arg1: memref<1x8x32xf32, #tpu.memory_space<vmem>>, %arg2: memref<1x8x32xf32, #tpu.memory_space<vmem>>, %arg3: memref<1x8x8xf32, #tpu.memory_space<vmem>>, %arg4: memref<32x32xf32, #tpu.memory_space<vmem>>, %arg5: memref<1x32xf32, #tpu.memory_space<vmem>>, %arg6: memref<32x64xf32, #tpu.memory_space<vmem>>, %arg7: memref<1x64xf32, #tpu.memory_space<vmem>>, %arg8: memref<32x32xf32, #tpu.memory_space<vmem>>, %arg9: memref<1x32xf32, #tpu.memory_space<vmem>>, %arg10: memref<1x32xf32, #tpu.memory_space<vmem>>, %arg11: memref<1x32xf32, #tpu.memory_space<vmem>>, %arg12: memref<1x8x32xf32, #tpu.memory_space<vmem>>) attributes {dimension_semantics = [#tpu.dimension_semantics<parallel>], iteration_bounds = array<i64: 2>, scalar_prefetch = 0 : i64, scratch_operands = 0 : i64, tpu.core_type = #tpu.core_type<tc>, window_params = [{transform_indices = @transform_0, window_bounds = array<i64: 1, 8, 32>}, {transform_indices = @transform_1, window_bounds = array<i64: 1, 8, 32>}, {transform_indices = @transform_2, window_bounds = array<i64: 1, 8, 8>}, {pipeline_mode = #tpu.pipeline_mode<synchronous>, transform_indices = @transform_3, window_bounds = array<i64: 32, 32>}, {pipeline_mode = #tpu.pipeline_mode<synchronous>, transform_indices = @transform_4, window_bounds = array<i64: 1, 32>}, {pipeline_mode = #tpu.pipeline_mode<synchronous>, transform_indices = @transform_5, window_bounds = array<i64: 32, 64>}, {pipeline_mode = #tpu.pipeline_mode<synchronous>, transform_indices = @transform_6, window_bounds = array<i64: 1, 64>}, {pipeline_mode = #tpu.pipeline_mode<synchronous>, transform_indices = @transform_7, window_bounds = array<i64: 32, 32>}, {pipeline_mode = #tpu.pipeline_mode<synchronous>, transform_indices = @transform_8, window_bounds = array<i64: 1, 32>}, {pipeline_mode = #tpu.pipeline_mode<synchronous>, transform_indices = @transform_9, window_bounds = array<i64: 1, 32>}, {pipeline_mode = #tpu.pipeline_mode<synchronous>, transform_indices = @transform_10, window_bounds = array<i64: 1, 32>}, {transform_indices = @transform_11, window_bounds = array<i64: 1, 8, 32>}]} {
    %c0 = arith.constant 0 : index
    %c0_0 = arith.constant 0 : index
    %c0_1 = arith.constant 0 : index
    %0 = vector.load %arg1[%c0, %c0_0, %c0_1] : memref<1x8x32xf32, #tpu.memory_space<vmem>>, vector<1x8x32xf32>
    %1 = vector.shape_cast %0 : vector<1x8x32xf32> to vector<8x32xf32>
    %c0_2 = arith.constant 0 : index
    %c0_3 = arith.constant 0 : index
    %c0_4 = arith.constant 0 : index
    %2 = vector.load %arg2[%c0_2, %c0_3, %c0_4] : memref<1x8x32xf32, #tpu.memory_space<vmem>>, vector<1x8x32xf32>
    %3 = vector.shape_cast %2 : vector<1x8x32xf32> to vector<8x32xf32>
    %c0_5 = arith.constant 0 : index
    %c0_6 = arith.constant 0 : index
    %c0_7 = arith.constant 0 : index
    %4 = vector.load %arg3[%c0_5, %c0_6, %c0_7] : memref<1x8x8xf32, #tpu.memory_space<vmem>>, vector<1x8x8xf32>
    %5 = vector.shape_cast %4 : vector<1x8x8xf32> to vector<8x8xf32>
    %c0_8 = arith.constant 0 : index
    %c0_9 = arith.constant 0 : index
    %6 = vector.load %arg4[%c0_8, %c0_9] : memref<32x32xf32, #tpu.memory_space<vmem>>, vector<32x32xf32>
    %cst = arith.constant dense<0.000000e+00> : vector<8x32xf32>
    %7 = tpu.matmul %1, %6, %cst {dimension_numbers = #tpu.dot_dimension_numbers<[1], [0], [0], [1], [0, 0, 1, 1], [], []>} : vector<8x32xf32>, vector<32x32xf32>, vector<8x32xf32> -> vector<8x32xf32>
    %c0_10 = arith.constant 0 : index
    %c0_11 = arith.constant 0 : index
    %8 = vector.load %arg5[%c0_10, %c0_11] : memref<1x32xf32, #tpu.memory_space<vmem>>, vector<1x32xf32>
    %9 = vector.broadcast %8 : vector<1x32xf32> to vector<8x32xf32>
    %10 = arith.addf %7, %9 : vector<8x32xf32>
    %c0_12 = arith.constant 0 : index
    %c0_13 = arith.constant 0 : index
    %11 = vector.load %arg6[%c0_12, %c0_13] : memref<32x64xf32, #tpu.memory_space<vmem>>, vector<32x64xf32>
    %cst_14 = arith.constant dense<0.000000e+00> : vector<8x64xf32>
    %12 = tpu.matmul %3, %11, %cst_14 {dimension_numbers = #tpu.dot_dimension_numbers<[1], [0], [0], [1], [0, 0, 1, 1], [], []>} : vector<8x32xf32>, vector<32x64xf32>, vector<8x64xf32> -> vector<8x64xf32>
    %c0_15 = arith.constant 0 : index
    %c0_16 = arith.constant 0 : index
    %13 = vector.load %arg7[%c0_15, %c0_16] : memref<1x64xf32, #tpu.memory_space<vmem>>, vector<1x64xf32>
    %14 = vector.broadcast %13 : vector<1x64xf32> to vector<8x64xf32>
    %15 = arith.addf %12, %14 : vector<8x64xf32>
    %16 = vector.extract_strided_slice %15 {offsets = [0, 0], sizes = [8, 32], strides = [1, 1]} : vector<8x64xf32> to vector<8x32xf32>
    %17 = vector.extract_strided_slice %15 {offsets = [0, 32], sizes = [8, 32], strides = [1, 1]} : vector<8x64xf32> to vector<8x32xf32>
    %c0_17 = arith.constant 0 : index
    %c0_18 = arith.constant 0 : index
    %18 = vector.load %arg8[%c0_17, %c0_18] : memref<32x32xf32, #tpu.memory_space<vmem>>, vector<32x32xf32>
    %cst_19 = arith.constant 0.000000e+00 : f32
    %19 = vector.broadcast %cst_19 : f32 to vector<8x32xf32>
    %20 = vector.extract_strided_slice %10 {offsets = [0, 0], sizes = [8, 8], strides = [1, 1]} : vector<8x32xf32> to vector<8x8xf32>
    %21 = vector.extract_strided_slice %16 {offsets = [0, 0], sizes = [8, 8], strides = [1, 1]} : vector<8x32xf32> to vector<8x8xf32>
    %22 = vector.extract_strided_slice %17 {offsets = [0, 0], sizes = [8, 8], strides = [1, 1]} : vector<8x32xf32> to vector<8x8xf32>
    %23 = tpu.transpose %21, [1, 0] : vector<8x8xf32> -> vector<8x8xf32>
    %cst_20 = arith.constant dense<0.000000e+00> : vector<8x8xf32>
    %24 = tpu.matmul %20, %23, %cst_20 {dimension_numbers = #tpu.dot_dimension_numbers<[1], [0], [0], [1], [0, 0, 1, 1], [], []>} : vector<8x8xf32>, vector<8x8xf32>, vector<8x8xf32> -> vector<8x8xf32>
    %cst_21 = arith.constant 0.353553385 : f32
    %25 = vector.broadcast %cst_21 : f32 to vector<8x8xf32>
    %26 = arith.mulf %24, %25 : vector<8x8xf32>
    %27 = arith.addf %26, %5 : vector<8x8xf32>
    %cst_22 = arith.constant dense<0xFF800000> : vector<8xf32>
    %28 = vector.multi_reduction <maximumf>, %27, %cst_22 [1] : vector<8x8xf32> to vector<8xf32>
    %29 = vector.shape_cast %28 : vector<8xf32> to vector<8x1xf32>
    %30 = vector.broadcast %29 : vector<8x1xf32> to vector<8x8xf32>
    %31 = arith.subf %27, %30 : vector<8x8xf32>
    %32 = math.exp %31 : vector<8x8xf32>
    %cst_23 = arith.constant dense<0.000000e+00> : vector<8xf32>
    %33 = vector.multi_reduction <add>, %32, %cst_23 [1] : vector<8x8xf32> to vector<8xf32>
    %34 = vector.shape_cast %33 : vector<8xf32> to vector<8x1xf32>
    %35 = tpu.reciprocal %34 {approx = true} : vector<8x1xf32> -> vector<8x1xf32>
    %36 = vector.broadcast %35 : vector<8x1xf32> to vector<8x8xf32>
    %37 = arith.mulf %32, %36 : vector<8x8xf32>
    %cst_24 = arith.constant dense<0.000000e+00> : vector<8x8xf32>
    %38 = tpu.matmul %37, %22, %cst_24 {dimension_numbers = #tpu.dot_dimension_numbers<[1], [0], [0], [1], [0, 0, 1, 1], [], []>} : vector<8x8xf32>, vector<8x8xf32>, vector<8x8xf32> -> vector<8x8xf32>
    %39 = vector.extract_strided_slice %18 {offsets = [0, 0], sizes = [8, 32], strides = [1, 1]} : vector<32x32xf32> to vector<8x32xf32>
    %cst_25 = arith.constant dense<0.000000e+00> : vector<8x32xf32>
    %40 = tpu.matmul %38, %39, %cst_25 {dimension_numbers = #tpu.dot_dimension_numbers<[1], [0], [0], [1], [0, 0, 1, 1], [], []>} : vector<8x8xf32>, vector<8x32xf32>, vector<8x32xf32> -> vector<8x32xf32>
    %41 = arith.addf %19, %40 : vector<8x32xf32>
    %42 = vector.extract_strided_slice %10 {offsets = [0, 8], sizes = [8, 8], strides = [1, 1]} : vector<8x32xf32> to vector<8x8xf32>
    %43 = vector.extract_strided_slice %16 {offsets = [0, 8], sizes = [8, 8], strides = [1, 1]} : vector<8x32xf32> to vector<8x8xf32>
    %44 = vector.extract_strided_slice %17 {offsets = [0, 8], sizes = [8, 8], strides = [1, 1]} : vector<8x32xf32> to vector<8x8xf32>
    %45 = tpu.transpose %43, [1, 0] : vector<8x8xf32> -> vector<8x8xf32>
    %cst_26 = arith.constant dense<0.000000e+00> : vector<8x8xf32>
    %46 = tpu.matmul %42, %45, %cst_26 {dimension_numbers = #tpu.dot_dimension_numbers<[1], [0], [0], [1], [0, 0, 1, 1], [], []>} : vector<8x8xf32>, vector<8x8xf32>, vector<8x8xf32> -> vector<8x8xf32>
    %cst_27 = arith.constant 0.353553385 : f32
    %47 = vector.broadcast %cst_27 : f32 to vector<8x8xf32>
    %48 = arith.mulf %46, %47 : vector<8x8xf32>
    %49 = arith.addf %48, %5 : vector<8x8xf32>
    %cst_28 = arith.constant dense<0xFF800000> : vector<8xf32>
    %50 = vector.multi_reduction <maximumf>, %49, %cst_28 [1] : vector<8x8xf32> to vector<8xf32>
    %51 = vector.shape_cast %50 : vector<8xf32> to vector<8x1xf32>
    %52 = vector.broadcast %51 : vector<8x1xf32> to vector<8x8xf32>
    %53 = arith.subf %49, %52 : vector<8x8xf32>
    %54 = math.exp %53 : vector<8x8xf32>
    %cst_29 = arith.constant dense<0.000000e+00> : vector<8xf32>
    %55 = vector.multi_reduction <add>, %54, %cst_29 [1] : vector<8x8xf32> to vector<8xf32>
    %56 = vector.shape_cast %55 : vector<8xf32> to vector<8x1xf32>
    %57 = tpu.reciprocal %56 {approx = true} : vector<8x1xf32> -> vector<8x1xf32>
    %58 = vector.broadcast %57 : vector<8x1xf32> to vector<8x8xf32>
    %59 = arith.mulf %54, %58 : vector<8x8xf32>
    %cst_30 = arith.constant dense<0.000000e+00> : vector<8x8xf32>
    %60 = tpu.matmul %59, %44, %cst_30 {dimension_numbers = #tpu.dot_dimension_numbers<[1], [0], [0], [1], [0, 0, 1, 1], [], []>} : vector<8x8xf32>, vector<8x8xf32>, vector<8x8xf32> -> vector<8x8xf32>
    %61 = vector.extract_strided_slice %18 {offsets = [8, 0], sizes = [8, 32], strides = [1, 1]} : vector<32x32xf32> to vector<8x32xf32>
    %cst_31 = arith.constant dense<0.000000e+00> : vector<8x32xf32>
    %62 = tpu.matmul %60, %61, %cst_31 {dimension_numbers = #tpu.dot_dimension_numbers<[1], [0], [0], [1], [0, 0, 1, 1], [], []>} : vector<8x8xf32>, vector<8x32xf32>, vector<8x32xf32> -> vector<8x32xf32>
    %63 = arith.addf %41, %62 : vector<8x32xf32>
    %64 = vector.extract_strided_slice %10 {offsets = [0, 16], sizes = [8, 8], strides = [1, 1]} : vector<8x32xf32> to vector<8x8xf32>
    %65 = vector.extract_strided_slice %16 {offsets = [0, 16], sizes = [8, 8], strides = [1, 1]} : vector<8x32xf32> to vector<8x8xf32>
    %66 = vector.extract_strided_slice %17 {offsets = [0, 16], sizes = [8, 8], strides = [1, 1]} : vector<8x32xf32> to vector<8x8xf32>
    %67 = tpu.transpose %65, [1, 0] : vector<8x8xf32> -> vector<8x8xf32>
    %cst_32 = arith.constant dense<0.000000e+00> : vector<8x8xf32>
    %68 = tpu.matmul %64, %67, %cst_32 {dimension_numbers = #tpu.dot_dimension_numbers<[1], [0], [0], [1], [0, 0, 1, 1], [], []>} : vector<8x8xf32>, vector<8x8xf32>, vector<8x8xf32> -> vector<8x8xf32>
    %cst_33 = arith.constant 0.353553385 : f32
    %69 = vector.broadcast %cst_33 : f32 to vector<8x8xf32>
    %70 = arith.mulf %68, %69 : vector<8x8xf32>
    %71 = arith.addf %70, %5 : vector<8x8xf32>
    %cst_34 = arith.constant dense<0xFF800000> : vector<8xf32>
    %72 = vector.multi_reduction <maximumf>, %71, %cst_34 [1] : vector<8x8xf32> to vector<8xf32>
    %73 = vector.shape_cast %72 : vector<8xf32> to vector<8x1xf32>
    %74 = vector.broadcast %73 : vector<8x1xf32> to vector<8x8xf32>
    %75 = arith.subf %71, %74 : vector<8x8xf32>
    %76 = math.exp %75 : vector<8x8xf32>
    %cst_35 = arith.constant dense<0.000000e+00> : vector<8xf32>
    %77 = vector.multi_reduction <add>, %76, %cst_35 [1] : vector<8x8xf32> to vector<8xf32>
    %78 = vector.shape_cast %77 : vector<8xf32> to vector<8x1xf32>
    %79 = tpu.reciprocal %78 {approx = true} : vector<8x1xf32> -> vector<8x1xf32>
    %80 = vector.broadcast %79 : vector<8x1xf32> to vector<8x8xf32>
    %81 = arith.mulf %76, %80 : vector<8x8xf32>
    %cst_36 = arith.constant dense<0.000000e+00> : vector<8x8xf32>
    %82 = tpu.matmul %81, %66, %cst_36 {dimension_numbers = #tpu.dot_dimension_numbers<[1], [0], [0], [1], [0, 0, 1, 1], [], []>} : vector<8x8xf32>, vector<8x8xf32>, vector<8x8xf32> -> vector<8x8xf32>
    %83 = vector.extract_strided_slice %18 {offsets = [16, 0], sizes = [8, 32], strides = [1, 1]} : vector<32x32xf32> to vector<8x32xf32>
    %cst_37 = arith.constant dense<0.000000e+00> : vector<8x32xf32>
    %84 = tpu.matmul %82, %83, %cst_37 {dimension_numbers = #tpu.dot_dimension_numbers<[1], [0], [0], [1], [0, 0, 1, 1], [], []>} : vector<8x8xf32>, vector<8x32xf32>, vector<8x32xf32> -> vector<8x32xf32>
    %85 = arith.addf %63, %84 : vector<8x32xf32>
    %86 = vector.extract_strided_slice %10 {offsets = [0, 24], sizes = [8, 8], strides = [1, 1]} : vector<8x32xf32> to vector<8x8xf32>
    %87 = vector.extract_strided_slice %16 {offsets = [0, 24], sizes = [8, 8], strides = [1, 1]} : vector<8x32xf32> to vector<8x8xf32>
    %88 = vector.extract_strided_slice %17 {offsets = [0, 24], sizes = [8, 8], strides = [1, 1]} : vector<8x32xf32> to vector<8x8xf32>
    %89 = tpu.transpose %87, [1, 0] : vector<8x8xf32> -> vector<8x8xf32>
    %cst_38 = arith.constant dense<0.000000e+00> : vector<8x8xf32>
    %90 = tpu.matmul %86, %89, %cst_38 {dimension_numbers = #tpu.dot_dimension_numbers<[1], [0], [0], [1], [0, 0, 1, 1], [], []>} : vector<8x8xf32>, vector<8x8xf32>, vector<8x8xf32> -> vector<8x8xf32>
    %cst_39 = arith.constant 0.353553385 : f32
    %91 = vector.broadcast %cst_39 : f32 to vector<8x8xf32>
    %92 = arith.mulf %90, %91 : vector<8x8xf32>
    %93 = arith.addf %92, %5 : vector<8x8xf32>
    %cst_40 = arith.constant dense<0xFF800000> : vector<8xf32>
    %94 = vector.multi_reduction <maximumf>, %93, %cst_40 [1] : vector<8x8xf32> to vector<8xf32>
    %95 = vector.shape_cast %94 : vector<8xf32> to vector<8x1xf32>
    %96 = vector.broadcast %95 : vector<8x1xf32> to vector<8x8xf32>
    %97 = arith.subf %93, %96 : vector<8x8xf32>
    %98 = math.exp %97 : vector<8x8xf32>
    %cst_41 = arith.constant dense<0.000000e+00> : vector<8xf32>
    %99 = vector.multi_reduction <add>, %98, %cst_41 [1] : vector<8x8xf32> to vector<8xf32>
    %100 = vector.shape_cast %99 : vector<8xf32> to vector<8x1xf32>
    %101 = tpu.reciprocal %100 {approx = true} : vector<8x1xf32> -> vector<8x1xf32>
    %102 = vector.broadcast %101 : vector<8x1xf32> to vector<8x8xf32>
    %103 = arith.mulf %98, %102 : vector<8x8xf32>
    %cst_42 = arith.constant dense<0.000000e+00> : vector<8x8xf32>
    %104 = tpu.matmul %103, %88, %cst_42 {dimension_numbers = #tpu.dot_dimension_numbers<[1], [0], [0], [1], [0, 0, 1, 1], [], []>} : vector<8x8xf32>, vector<8x8xf32>, vector<8x8xf32> -> vector<8x8xf32>
    %105 = vector.extract_strided_slice %18 {offsets = [24, 0], sizes = [8, 32], strides = [1, 1]} : vector<32x32xf32> to vector<8x32xf32>
    %cst_43 = arith.constant dense<0.000000e+00> : vector<8x32xf32>
    %106 = tpu.matmul %104, %105, %cst_43 {dimension_numbers = #tpu.dot_dimension_numbers<[1], [0], [0], [1], [0, 0, 1, 1], [], []>} : vector<8x8xf32>, vector<8x32xf32>, vector<8x32xf32> -> vector<8x32xf32>
    %107 = arith.addf %85, %106 : vector<8x32xf32>
    %c0_44 = arith.constant 0 : index
    %c0_45 = arith.constant 0 : index
    %108 = vector.load %arg9[%c0_44, %c0_45] : memref<1x32xf32, #tpu.memory_space<vmem>>, vector<1x32xf32>
    %109 = vector.broadcast %108 : vector<1x32xf32> to vector<8x32xf32>
    %110 = arith.addf %107, %109 : vector<8x32xf32>
    %111 = arith.addf %110, %1 : vector<8x32xf32>
    %cst_46 = arith.constant dense<0.000000e+00> : vector<8xf32>
    %112 = vector.multi_reduction <add>, %111, %cst_46 [1] : vector<8x32xf32> to vector<8xf32>
    %113 = vector.shape_cast %112 : vector<8xf32> to vector<8x1xf32>
    %cst_47 = arith.constant 3.200000e+01 : f32
    %114 = vector.broadcast %cst_47 : f32 to vector<8x1xf32>
    %115 = arith.divf %113, %114 : vector<8x1xf32>
    %116 = vector.broadcast %115 : vector<8x1xf32> to vector<8x32xf32>
    %117 = arith.subf %111, %116 : vector<8x32xf32>
    %118 = arith.mulf %117, %117 : vector<8x32xf32>
    %cst_48 = arith.constant dense<0.000000e+00> : vector<8xf32>
    %119 = vector.multi_reduction <add>, %118, %cst_48 [1] : vector<8x32xf32> to vector<8xf32>
    %120 = vector.shape_cast %119 : vector<8xf32> to vector<8x1xf32>
    %cst_49 = arith.constant 3.200000e+01 : f32
    %121 = vector.broadcast %cst_49 : f32 to vector<8x1xf32>
    %122 = arith.divf %120, %121 : vector<8x1xf32>
    %123 = vector.broadcast %115 : vector<8x1xf32> to vector<8x32xf32>
    %124 = arith.subf %111, %123 : vector<8x32xf32>
    %cst_50 = arith.constant 9.99999974E-6 : f32
    %125 = vector.broadcast %cst_50 : f32 to vector<8x1xf32>
    %126 = arith.addf %122, %125 : vector<8x1xf32>
    %127 = math.rsqrt %126 : vector<8x1xf32>
    %128 = vector.broadcast %127 : vector<8x1xf32> to vector<8x32xf32>
    %129 = arith.mulf %124, %128 : vector<8x32xf32>
    %c0_51 = arith.constant 0 : index
    %c0_52 = arith.constant 0 : index
    %130 = vector.load %arg10[%c0_51, %c0_52] : memref<1x32xf32, #tpu.memory_space<vmem>>, vector<1x32xf32>
    %131 = vector.broadcast %130 : vector<1x32xf32> to vector<8x32xf32>
    %132 = arith.mulf %129, %131 : vector<8x32xf32>
    %c0_53 = arith.constant 0 : index
    %c0_54 = arith.constant 0 : index
    %133 = vector.load %arg11[%c0_53, %c0_54] : memref<1x32xf32, #tpu.memory_space<vmem>>, vector<1x32xf32>
    %134 = vector.broadcast %133 : vector<1x32xf32> to vector<8x32xf32>
    %135 = arith.addf %132, %134 : vector<8x32xf32>
    %c0_55 = arith.constant 0 : index
    %c0_56 = arith.constant 0 : index
    %c0_57 = arith.constant 0 : index
    %136 = vector.load %arg12[%c0_55, %c0_56, %c0_57] : memref<1x8x32xf32, #tpu.memory_space<vmem>>, vector<1x8x32xf32>
    %137 = vector.shape_cast %136 : vector<1x8x32xf32> to vector<8x32xf32>
    %138 = vector.shape_cast %135 : vector<8x32xf32> to vector<1x8x32xf32>
    tpu.vector_store %arg12[%c0_55, %c0_56, %c0_57], %138 {strides = array<i32>} : memref<1x8x32xf32, #tpu.memory_space<vmem>>, vector<1x8x32xf32>,
    return
  }
  func.func @transform_0(%arg0: i32) -> (i32, i32, i32) {
    %c0_i32 = arith.constant 0 : i32
    %c0_i32_0 = arith.constant 0 : i32
    %c0_i32_1 = arith.constant 0 : i32
    return %arg0, %c0_i32, %c0_i32_0 : i32, i32, i32
  }
  func.func @transform_1(%arg0: i32) -> (i32, i32, i32) {
    %c0_i32 = arith.constant 0 : i32
    %c0_i32_0 = arith.constant 0 : i32
    %c0_i32_1 = arith.constant 0 : i32
    return %arg0, %c0_i32, %c0_i32_0 : i32, i32, i32
  }
  func.func @transform_2(%arg0: i32) -> (i32, i32, i32) {
    %c0_i32 = arith.constant 0 : i32
    %c0_i32_0 = arith.constant 0 : i32
    %c0_i32_1 = arith.constant 0 : i32
    return %arg0, %c0_i32, %c0_i32_0 : i32, i32, i32
  }
  func.func @transform_3(%arg0: i32) -> (i32, i32) {
    %c0_i32 = arith.constant 0 : i32
    %c0_i32_0 = arith.constant 0 : i32
    %c0_i32_1 = arith.constant 0 : i32
    return %c0_i32, %c0_i32_0 : i32, i32
  }
  func.func @transform_4(%arg0: i32) -> (i32, i32) {
    %c0_i32 = arith.constant 0 : i32
    %c0_i32_0 = arith.constant 0 : i32
    %c0_i32_1 = arith.constant 0 : i32
    return %c0_i32, %c0_i32_0 : i32, i32
  }
  func.func @transform_5(%arg0: i32) -> (i32, i32) {
    %c0_i32 = arith.constant 0 : i32
    %c0_i32_0 = arith.constant 0 : i32
    %c0_i32_1 = arith.constant 0 : i32
    return %c0_i32, %c0_i32_0 : i32, i32
  }
  func.func @transform_6(%arg0: i32) -> (i32, i32) {
    %c0_i32 = arith.constant 0 : i32
    %c0_i32_0 = arith.constant 0 : i32
    %c0_i32_1 = arith.constant 0 : i32
    return %c0_i32, %c0_i32_0 : i32, i32
  }
  func.func @transform_7(%arg0: i32) -> (i32, i32) {
    %c0_i32 = arith.constant 0 : i32
    %c0_i32_0 = arith.constant 0 : i32
    %c0_i32_1 = arith.constant 0 : i32
    return %c0_i32, %c0_i32_0 : i32, i32
  }
  func.func @transform_8(%arg0: i32) -> (i32, i32) {
    %c0_i32 = arith.constant 0 : i32
    %c0_i32_0 = arith.constant 0 : i32
    %c0_i32_1 = arith.constant 0 : i32
    return %c0_i32, %c0_i32_0 : i32, i32
  }
  func.func @transform_9(%arg0: i32) -> (i32, i32) {
    %c0_i32 = arith.constant 0 : i32
    %c0_i32_0 = arith.constant 0 : i32
    %c0_i32_1 = arith.constant 0 : i32
    return %c0_i32, %c0_i32_0 : i32, i32
  }
  func.func @transform_10(%arg0: i32) -> (i32, i32) {
    %c0_i32 = arith.constant 0 : i32
    %c0_i32_0 = arith.constant 0 : i32
    %c0_i32_1 = arith.constant 0 : i32
    return %c0_i32, %c0_i32_0 : i32, i32
  }
  func.func @transform_11(%arg0: i32) -> (i32, i32, i32) {
    %c0_i32 = arith.constant 0 : i32
    %c0_i32_0 = arith.constant 0 : i32
    %c0_i32_1 = arith.constant 0 : i32
    return %arg0, %c0_i32, %c0_i32_0 : i32, i32, i32
  }
}

</mosaic_0001>

<llo_original>
// kernel: tpu_custom_call.1
$region0: #{tpu_custom_call.1}
  #allocation0 [shape = 'u32[]', space=smem, size = 0x4, offset = 0x4, fixed_abs, tag = 'smem constant byte address 0x4 - core index']
  #allocation1 [shape = 'u32[144,128]{1,0:T(1,128)}', space=vmem, size = 0x12000, scoped, tag = 'internal scratch']
  %s0 = inlined_call_operand.hbm [shape: f32[2,8,32], index: 0, kind: input, shape index: {}]
  %s1 = inlined_call_operand.hbm [shape: f32[2,8,32], index: 1, kind: input, shape index: {}]
  %s2 = inlined_call_operand.hbm [shape: f32[2,8,8], index: 2, kind: input, shape index: {}]
  %s3 = inlined_call_operand.hbm [shape: f32[32,32], index: 3, kind: input, shape index: {}]
  %s4 = inlined_call_operand.vmem [shape: f32[1,32], index: 4, kind: input, shape index: {}]
  %s5 = inlined_call_operand.hbm [shape: f32[32,64], index: 5, kind: input, shape index: {}]
  %s6 = inlined_call_operand.vmem [shape: f32[1,64], index: 6, kind: input, shape index: {}]
  %s7 = inlined_call_operand.hbm [shape: f32[32,32], index: 7, kind: input, shape index: {}]
  %s8 = inlined_call_operand.vmem [shape: f32[1,32], index: 8, kind: input, shape index: {}]
  %s9 = inlined_call_operand.vmem [shape: f32[1,32], index: 9, kind: input, shape index: {}]
  %s10 = inlined_call_operand.vmem [shape: f32[1,32], index: 10, kind: input, shape index: {}]
  %s11 = inlined_call_operand.hbm [shape: f32[2,8,32], index: 11, kind: output, shape index: {}]
  %s12 = sld [smem:[#allocation0]]
  $region101: #{tpu_custom_call.1} parent=0
    _
  %s14 = ssub.s32 1, %s12
  %s15 = scalar_select 0, %s14, %s12
  $region1: #{tpu_custom_call.1} parent=0
    #allocation2 [shape = 'u8[8192]{0}', space=vmem, size = 0x2000, scoped, tag = 'input window, operand 0']
    #allocation3 [shape = 's32[2]{0}', space=sflag, size = 0x8, scoped, tag = 'scoped memory for tpu_custom_call.1']
    #allocation4 [shape = 's32[2]{0}', space=sflag, size = 0x8, scoped, tag = 'scoped memory for tpu_custom_call.1']
    #allocation5 [shape = 'u8[8192]{0}', space=vmem, size = 0x2000, scoped, tag = 'input window, operand 1']
    #allocation6 [shape = 's32[2]{0}', space=sflag, size = 0x8, scoped, tag = 'scoped memory for tpu_custom_call.1']
    #allocation7 [shape = 'u8[8192]{0}', space=vmem, size = 0x2000, scoped, tag = 'input window, operand 2']
    #allocation8 [shape = 'u8[16384]{0}', space=vmem, size = 0x4000, scoped, tag = 'input window, operand 3, single buffered']
    #allocation9 [shape = 's32[1]{0}', space=sflag, size = 0x4, scoped, tag = 'scoped memory for tpu_custom_call.1']
    #allocation10 [shape = 'u8[16384]{0}', space=vmem, size = 0x4000, scoped, tag = 'input window, operand 5, single buffered']
    #allocation11 [shape = 'u8[16384]{0}', space=vmem, size = 0x4000, scoped, tag = 'input window, operand 7, single buffered']
    #allocation12 [shape = 's32[1]{0}', space=sflag, size = 0x4, scoped, tag = 'scoped memory for tpu_custom_call.1']
    #allocation13 [shape = 'u8[8192]{0}', space=vmem, size = 0x2000, scoped, tag = 'output window, operand 0']
    %16 = vsyncpa [#allocation3], 0
    %s17 = scalar_lea.sflag [#allocation3], 1
    %18 = vsyncpa %s17, 0
    %19 = vsyncpa [#allocation6], 0
    %s20 = scalar_lea.sflag [#allocation6], 1
    %21 = vsyncpa %s20, 0
    %22 = vsyncpa [#allocation9], 0
    %23 = vsyncpa [#allocation12], 0
    %24 = vsyncpa [#allocation4], 0
    %s25 = scalar_lea.sflag [#allocation4], 1
    %26 = vsyncpa %s25, 0
    loop: start=0, step=1, limit=4
    $region2: #{tpu_custom_call.1} parent=1 // loop_pre_header
      _
    $region3: #{tpu_custom_call.1} parent=1 // loop_header
      %s28 = sphi 0, %s32
      %p29 = scmp.ge.s32.totalorder %s28, 4
      %s38 = sphi 0, %s40
      %s41 = sphi 0, %s38
      %s42 = sphi 0, %s41
      %s58 = sphi 0, %s42
      %s64 = sphi 0, %s66
      %s67 = sphi 0, %s64
      %s68 = sphi 0, %s67
      %s84 = sphi 0, %s68
      %s90 = sphi 0, %s92
      %s93 = sphi 0, %s90
      %s94 = sphi 0, %s93
      %s110 = sphi 0, %s94
      %s114 = sphi 0, %s114
      %s116 = sphi 0, %s114
      %s117 = sphi 0, %s116
      %s131 = sphi 0, %s117
      %s135 = sphi 0, %s135
      %s137 = sphi 0, %s135
      %s138 = sphi 0, %s137
      %s152 = sphi 0, %s138
      %s156 = sphi 0, %s156
      %s158 = sphi 0, %s156
      %s159 = sphi 0, %s158
      %s173 = sphi 0, %s159
      %s177 = sphi 0, %s177
      %s179 = sphi 0, %s177
      %s180 = sphi 0, %s179
      %s194 = sphi 0, %s180
      %s198 = sphi 0, %s198
      %s200 = sphi 0, %s198
      %s201 = sphi 0, %s200
      %s215 = sphi 0, %s201
      %s219 = sphi 0, %s219
      %s221 = sphi 0, %s219
      %s222 = sphi 0, %s221
      %s236 = sphi 0, %s222
      %s240 = sphi 0, %s240
      %s242 = sphi 0, %s240
      %s243 = sphi 0, %s242
      %s257 = sphi 0, %s243
      %s261 = sphi 0, %s261
      %s263 = sphi 0, %s261
      %s264 = sphi 0, %s263
      %s278 = sphi 0, %s264
      %s284 = sphi 0, %s286
      %s287 = sphi 0, %s284
      %s288 = sphi 0, %s287
      %s304 = sphi 0, %s288
    $region4: #{tpu_custom_call.1} parent=1 // loop_header_branch
      %31 = sbr.rel (%p29) target = $region8
    $region5: #{tpu_custom_call.1} parent=1 // loop_body
      %s33 = ssub.s32 %s28, 1
      %s34 = ssub.s32 %s28, 2
      %s35 = sadd.s32 %s28, 1
      %s36 = ssub.s32 %s28, %s35
      %p37 = scmp.eq.s32.totalorder %s36, 0
      %s39 = sadd.s32 %s38, 1
      %s40 = scalar_select %p37, %s38, %s39
      %p43 = pneg %p37
      %p44 = scmp.eq.s32.totalorder %s28, 1
      %p45 = por %p43, %p44
      %p46 = scmp.ne.s32.totalorder %s38, %s41
      %p47 = scmp.eq.s32.totalorder %s28, 0
      %p48 = por %p46, %p47
      %p49 = scmp.ne.s32.totalorder %s38, %s41
      %p50 = scmp.eq.s32.totalorder %s33, 1
      %p51 = por %p49, %p50
      %p52 = scmp.ne.s32.totalorder %s41, %s42
      %p53 = scmp.eq.s32.totalorder %s33, 0
      %p54 = por %p52, %p53
      %p55 = scmp.ne.s32.totalorder %s41, %s42
      %p56 = scmp.eq.s32.totalorder %s34, 1
      %p57 = por %p55, %p56
      %p59 = scmp.ne.s32.totalorder %s42, %s58
      %p60 = scmp.eq.s32.totalorder %s34, 0
      %p61 = por %p59, %p60
      %s62 = ssub.s32 %s28, %s35
      %p63 = scmp.eq.s32.totalorder %s62, 0
      %s65 = sadd.s32 %s64, 1
      %s66 = scalar_select %p63, %s64, %s65
      %p69 = pneg %p63
      %p70 = scmp.eq.s32.totalorder %s28, 1
      %p71 = por %p69, %p70
      %p72 = scmp.ne.s32.totalorder %s64, %s67
      %p73 = scmp.eq.s32.totalorder %s28, 0
      %p74 = por %p72, %p73
      %p75 = scmp.ne.s32.totalorder %s64, %s67
      %p76 = scmp.eq.s32.totalorder %s33, 1
      %p77 = por %p75, %p76
      %p78 = scmp.ne.s32.totalorder %s67, %s68
      %p79 = scmp.eq.s32.totalorder %s33, 0
      %p80 = por %p78, %p79
      %p81 = scmp.ne.s32.totalorder %s67, %s68
      %p82 = scmp.eq.s32.totalorder %s34, 1
      %p83 = por %p81, %p82
      %p85 = scmp.ne.s32.totalorder %s68, %s84
      %p86 = scmp.eq.s32.totalorder %s34, 0
      %p87 = por %p85, %p86
      %s88 = ssub.s32 %s28, %s35
      %p89 = scmp.eq.s32.totalorder %s88, 0
      %s91 = sadd.s32 %s90, 1
      %s92 = scalar_select %p89, %s90, %s91
      %p95 = pneg %p89
      %p96 = scmp.eq.s32.totalorder %s28, 1
      %p97 = por %p95, %p96
      %p98 = scmp.ne.s32.totalorder %s90, %s93
      %p99 = scmp.eq.s32.totalorder %s28, 0
      %p100 = por %p98, %p99
      %p101 = scmp.ne.s32.totalorder %s90, %s93
      %p102 = scmp.eq.s32.totalorder %s33, 1
      %p103 = por %p101, %p102
      %p104 = scmp.ne.s32.totalorder %s93, %s94
      %p105 = scmp.eq.s32.totalorder %s33, 0
      %p106 = por %p104, %p105
      %p107 = scmp.ne.s32.totalorder %s93, %s94
      %p108 = scmp.eq.s32.totalorder %s34, 1
      %p109 = por %p107, %p108
      %p111 = scmp.ne.s32.totalorder %s94, %s110
      %p112 = scmp.eq.s32.totalorder %s34, 0
      %p113 = por %p111, %p112
      %s115 = sadd.s32 %s114, 1
      %p118 = scmp.eq.s32.totalorder %s28, 1
      %p119 = scmp.ne.s32.totalorder %s114, %s116
      %p120 = scmp.eq.s32.totalorder %s28, 0
      %p121 = por %p119, %p120
      %p122 = scmp.ne.s32.totalorder %s114, %s116
      %p123 = scmp.eq.s32.totalorder %s33, 1
      %p124 = por %p122, %p123
      %p125 = scmp.ne.s32.totalorder %s116, %s117
      %p126 = scmp.eq.s32.totalorder %s33, 0
      %p127 = por %p125, %p126
      %p128 = scmp.ne.s32.totalorder %s116, %s117
      %p129 = scmp.eq.s32.totalorder %s34, 1
      %p130 = por %p128, %p129
      %p132 = scmp.ne.s32.totalorder %s117, %s131
      %p133 = scmp.eq.s32.totalorder %s34, 0
      %p134 = por %p132, %p133
      %s136 = sadd.s32 %s135, 1
      %p139 = scmp.eq.s32.totalorder %s28, 1
      %p140 = scmp.ne.s32.totalorder %s135, %s137
      %p141 = scmp.eq.s32.totalorder %s28, 0
      %p142 = por %p140, %p141
      %p143 = scmp.ne.s32.totalorder %s135, %s137
      %p144 = scmp.eq.s32.totalorder %s33, 1
      %p145 = por %p143, %p144
      %p146 = scmp.ne.s32.totalorder %s137, %s138
      %p147 = scmp.eq.s32.totalorder %s33, 0
      %p148 = por %p146, %p147
      %p149 = scmp.ne.s32.totalorder %s137, %s138
      %p150 = scmp.eq.s32.totalorder %s34, 1
      %p151 = por %p149, %p150
      %p153 = scmp.ne.s32.totalorder %s138, %s152
      %p154 = scmp.eq.s32.totalorder %s34, 0
      %p155 = por %p153, %p154
      %s157 = sadd.s32 %s156, 1
      %p160 = scmp.eq.s32.totalorder %s28, 1
      %p161 = scmp.ne.s32.totalorder %s156, %s158
      %p162 = scmp.eq.s32.totalorder %s28, 0
      %p163 = por %p161, %p162
      %p164 = scmp.ne.s32.totalorder %s156, %s158
      %p165 = scmp.eq.s32.totalorder %s33, 1
      %p166 = por %p164, %p165
      %p167 = scmp.ne.s32.totalorder %s158, %s159
      %p168 = scmp.eq.s32.totalorder %s33, 0
      %p169 = por %p167, %p168
      %p170 = scmp.ne.s32.totalorder %s158, %s159
      %p171 = scmp.eq.s32.totalorder %s34, 1
      %p172 = por %p170, %p171
      %p174 = scmp.ne.s32.totalorder %s159, %s173
      %p175 = scmp.eq.s32.totalorder %s34, 0
      %p176 = por %p174, %p175
      %s178 = sadd.s32 %s177, 1
      %p181 = scmp.eq.s32.totalorder %s28, 1
      %p182 = scmp.ne.s32.totalorder %s177, %s179
      %p183 = scmp.eq.s32.totalorder %s28, 0
      %p184 = por %p182, %p183
      %p185 = scmp.ne.s32.totalorder %s177, %s179
      %p186 = scmp.eq.s32.totalorder %s33, 1
      %p187 = por %p185, %p186
      %p188 = scmp.ne.s32.totalorder %s179, %s180
      %p189 = scmp.eq.s32.totalorder %s33, 0
      %p190 = por %p188, %p189
      %p191 = scmp.ne.s32.totalorder %s179, %s180
      %p192 = scmp.eq.s32.totalorder %s34, 1
      %p193 = por %p191, %p192
      %p195 = scmp.ne.s32.totalorder %s180, %s194
      %p196 = scmp.eq.s32.totalorder %s34, 0
      %p197 = por %p195, %p196
      %s199 = sadd.s32 %s198, 1
      %p202 = scmp.eq.s32.totalorder %s28, 1
      %p203 = scmp.ne.s32.totalorder %s198, %s200
      %p204 = scmp.eq.s32.totalorder %s28, 0
      %p205 = por %p203, %p204
      %p206 = scmp.ne.s32.totalorder %s198, %s200
      %p207 = scmp.eq.s32.totalorder %s33, 1
      %p208 = por %p206, %p207
      %p209 = scmp.ne.s32.totalorder %s200, %s201
      %p210 = scmp.eq.s32.totalorder %s33, 0
      %p211 = por %p209, %p210
      %p212 = scmp.ne.s32.totalorder %s200, %s201
      %p213 = scmp.eq.s32.totalorder %s34, 1
      %p214 = por %p212, %p213
      %p216 = scmp.ne.s32.totalorder %s201, %s215
      %p217 = scmp.eq.s32.totalorder %s34, 0
      %p218 = por %p216, %p217
      %s220 = sadd.s32 %s219, 1
      %p223 = scmp.eq.s32.totalorder %s28, 1
      %p224 = scmp.ne.s32.totalorder %s219, %s221
      %p225 = scmp.eq.s32.totalorder %s28, 0
      %p226 = por %p224, %p225
      %p227 = scmp.ne.s32.totalorder %s219, %s221
      %p228 = scmp.eq.s32.totalorder %s33, 1
      %p229 = por %p227, %p228
      %p230 = scmp.ne.s32.totalorder %s221, %s222
      %p231 = scmp.eq.s32.totalorder %s33, 0
      %p232 = por %p230, %p231
      %p233 = scmp.ne.s32.totalorder %s221, %s222
      %p234 = scmp.eq.s32.totalorder %s34, 1
      %p235 = por %p233, %p234
      %p237 = scmp.ne.s32.totalorder %s222, %s236
      %p238 = scmp.eq.s32.totalorder %s34, 0
      %p239 = por %p237, %p238
      %s241 = sadd.s32 %s240, 1
      %p244 = scmp.eq.s32.totalorder %s28, 1
      %p245 = scmp.ne.s32.totalorder %s240, %s242
      %p246 = scmp.eq.s32.totalorder %s28, 0
      %p247 = por %p245, %p246
      %p248 = scmp.ne.s32.totalorder %s240, %s242
      %p249 = scmp.eq.s32.totalorder %s33, 1
      %p250 = por %p248, %p249
      %p251 = scmp.ne.s32.totalorder %s242, %s243
      %p252 = scmp.eq.s32.totalorder %s33, 0
      %p253 = por %p251, %p252
      %p254 = scmp.ne.s32.totalorder %s242, %s243
      %p255 = scmp.eq.s32.totalorder %s34, 1
      %p256 = por %p254, %p255
      %p258 = scmp.ne.s32.totalorder %s243, %s257
      %p259 = scmp.eq.s32.totalorder %s34, 0
      %p260 = por %p258, %p259
      %s262 = sadd.s32 %s261, 1
      %p265 = scmp.eq.s32.totalorder %s28, 1
      %p266 = scmp.ne.s32.totalorder %s261, %s263
      %p267 = scmp.eq.s32.totalorder %s28, 0
      %p268 = por %p266, %p267
      %p269 = scmp.ne.s32.totalorder %s261, %s263
      %p270 = scmp.eq.s32.totalorder %s33, 1
      %p271 = por %p269, %p270
      %p272 = scmp.ne.s32.totalorder %s263, %s264
      %p273 = scmp.eq.s32.totalorder %s33, 0
      %p274 = por %p272, %p273
      %p275 = scmp.ne.s32.totalorder %s263, %s264
      %p276 = scmp.eq.s32.totalorder %s34, 1
      %p277 = por %p275, %p276
      %p279 = scmp.ne.s32.totalorder %s264, %s278
      %p280 = scmp.eq.s32.totalorder %s34, 0
      %p281 = por %p279, %p280
      %s282 = ssub.s32 %s28, %s35
      %p283 = scmp.eq.s32.totalorder %s282, 0
      %s285 = sadd.s32 %s284, 1
      %s286 = scalar_select %p283, %s284, %s285
      %p289 = pneg %p283
      %p290 = scmp.eq.s32.totalorder %s28, 1
      %p291 = por %p289, %p290
      %p292 = scmp.ne.s32.totalorder %s284, %s287
      %p293 = scmp.eq.s32.totalorder %s28, 0
      %p294 = por %p292, %p293
      %p295 = scmp.ne.s32.totalorder %s284, %s287
      %p296 = scmp.eq.s32.totalorder %s33, 1
      %p297 = por %p295, %p296
      %p298 = scmp.ne.s32.totalorder %s287, %s288
      %p299 = scmp.eq.s32.totalorder %s33, 0
      %p300 = por %p298, %p299
      %p301 = scmp.ne.s32.totalorder %s287, %s288
      %p302 = scmp.eq.s32.totalorder %s34, 1
      %p303 = por %p301, %p302
      %p305 = scmp.ne.s32.totalorder %s288, %s304
      %p306 = scmp.eq.s32.totalorder %s34, 0
      %p307 = por %p305, %p306
      %p308 = scmp.le.s32.totalorder 1, %s28
      %p309 = scmp.lt.s32.totalorder %s28, 3
      %p310 = pnand %p308, %p309
      %p311 = pneg %p310
      // Predicated region
      $region9: #{tpu_custom_call.1} parent=5 // pred_check
        _
      $region10: #{tpu_custom_call.1} parent=5 // pred_check_branch
        %313 = sbr.rel (%p310) target = $region12
      $region11: #{tpu_custom_call.1} parent=5 // pred_region
        %s314 = ssub.s32 %s28, 1
        // Predicated region
        $region13: #{tpu_custom_call.1} parent=11 // pred_check
          %p315 = pneg %p127
        $region14: #{tpu_custom_call.1} parent=11 // pred_check_branch
          %317 = sbr.rel (%p315) target = $region16
        $region15: #{tpu_custom_call.1} parent=11 // pred_region
          %s319 = ssub.s32 512, 512
          %320 = vsyncadd [#allocation9], %s319
          %s321 = sshll.u32 [#allocation8], 4
          %s322 = int_to_ptr.vmem [resolvable:$true] %s321
          %327 = dma.hbm_to_vmem [thread:$0]  %s3, 512, %s322, [#allocation9], 128, 128, 8
        $region16: #{tpu_custom_call.1} parent=11 // pred_fallthru
          _
        // Predicated region
        $region17: #{tpu_custom_call.1} parent=11 // pred_check
          %p328 = pneg %p148
        $region18: #{tpu_custom_call.1} parent=11 // pred_check_branch
          %330 = sbr.rel (%p328) target = $region20
        $region19: #{tpu_custom_call.1} parent=11 // pred_region
          _
        $region20: #{tpu_custom_call.1} parent=11 // pred_fallthru
          _
        // Predicated region
        $region21: #{tpu_custom_call.1} parent=11 // pred_check
          %p331 = pneg %p169
        $region22: #{tpu_custom_call.1} parent=11 // pred_check_branch
          %333 = sbr.rel (%p331) target = $region24
        $region23: #{tpu_custom_call.1} parent=11 // pred_region
          %s335 = ssub.s32 512, 512
          %336 = vsyncadd [#allocation9], %s335
          %s337 = sshll.u32 [#allocation10], 4
          %s338 = int_to_ptr.vmem [resolvable:$true] %s337
          %343 = dma.hbm_to_vmem [thread:$0]  %s5, 512, %s338, [#allocation9], 128, 128, 8
        $region24: #{tpu_custom_call.1} parent=11 // pred_fallthru
          _
        // Predicated region
        $region25: #{tpu_custom_call.1} parent=11 // pred_check
          %p344 = pneg %p190
        $region26: #{tpu_custom_call.1} parent=11 // pred_check_branch
          %346 = sbr.rel (%p344) target = $region28
        $region27: #{tpu_custom_call.1} parent=11 // pred_region
          _
        $region28: #{tpu_custom_call.1} parent=11 // pred_fallthru
          _
        // Predicated region
        $region29: #{tpu_custom_call.1} parent=11 // pred_check
          %p347 = pneg %p211
        $region30: #{tpu_custom_call.1} parent=11 // pred_check_branch
          %349 = sbr.rel (%p347) target = $region32
        $region31: #{tpu_custom_call.1} parent=11 // pred_region
          %s351 = ssub.s32 512, 512
          %352 = vsyncadd [#allocation12], %s351
          %s353 = sshll.u32 [#allocation11], 4
          %s354 = int_to_ptr.vmem [resolvable:$true] %s353
          %359 = dma.hbm_to_vmem [thread:$0]  %s7, 512, %s354, [#allocation12], 128, 128, 8
        $region32: #{tpu_custom_call.1} parent=11 // pred_fallthru
          _
        // Predicated region
        $region33: #{tpu_custom_call.1} parent=11 // pred_check
          %p360 = pneg %p232
        $region34: #{tpu_custom_call.1} parent=11 // pred_check_branch
          %362 = sbr.rel (%p360) target = $region36
        $region35: #{tpu_custom_call.1} parent=11 // pred_region
          _
        $region36: #{tpu_custom_call.1} parent=11 // pred_fallthru
          _
        // Predicated region
        $region37: #{tpu_custom_call.1} parent=11 // pred_check
          %p363 = pneg %p253
        $region38: #{tpu_custom_call.1} parent=11 // pred_check_branch
          %365 = sbr.rel (%p363) target = $region40
        $region39: #{tpu_custom_call.1} parent=11 // pred_region
          _
        $region40: #{tpu_custom_call.1} parent=11 // pred_fallthru
          _
        // Predicated region
        $region41: #{tpu_custom_call.1} parent=11 // pred_check
          %p366 = pneg %p274
        $region42: #{tpu_custom_call.1} parent=11 // pred_check_branch
          %368 = sbr.rel (%p366) target = $region44
        $region43: #{tpu_custom_call.1} parent=11 // pred_region
          _
        $region44: #{tpu_custom_call.1} parent=11 // pred_fallthru
          _
      $region12: #{tpu_custom_call.1} parent=5 // pred_fallthru
        _
      %p369 = scmp.lt.s32.totalorder %s28, 2
      // Predicated region
      $region45: #{tpu_custom_call.1} parent=5 // pred_check
        %p370 = pneg %p369
      $region46: #{tpu_custom_call.1} parent=5 // pred_check_branch
        %372 = sbr.rel (%p370) target = $region48
      $region47: #{tpu_custom_call.1} parent=5 // pred_region
        // Predicated region
        $region49: #{tpu_custom_call.1} parent=47 // pred_check
          %p373 = pneg %p48
        $region50: #{tpu_custom_call.1} parent=47 // pred_check_branch
          %375 = sbr.rel (%p373) target = $region52
        $region51: #{tpu_custom_call.1} parent=47 // pred_region
          %s376 = sand.u32 %s38, 1
          %s377 = scalar_lea.sflag [#allocation3], %s376
          %s378 = sand.u32 %s38, 1
          %s379 = smul.addr %s378, 8
          %s380 = scalar_lea.vmem [#allocation2], %s379
          %s382 = ssub.s32 128, 128
          %383 = vsyncadd %s377, %s382
          %s384 = smul.addr %s28, 128
          %s385 = scalar_lea.hbm %s0, %s384
          %s387 = sshll.u32 %s380, 4
          %s388 = int_to_ptr.vmem [resolvable:$true] %s387
          %390 = dma.hbm_to_vmem [thread:$0]  %s385, 128, %s388, %s377
        $region52: #{tpu_custom_call.1} parent=47 // pred_fallthru
          _
        // Predicated region
        $region53: #{tpu_custom_call.1} parent=47 // pred_check
          %p391 = pneg %p74
        $region54: #{tpu_custom_call.1} parent=47 // pred_check_branch
          %393 = sbr.rel (%p391) target = $region56
        $region55: #{tpu_custom_call.1} parent=47 // pred_region
          %s394 = sand.u32 %s28, 1
          %s395 = scalar_lea.sflag [#allocation6], %s394
          %s396 = sand.u32 %s64, 1
          %s397 = smul.addr %s396, 8
          %s398 = scalar_lea.vmem [#allocation5], %s397
          %s400 = ssub.s32 128, 128
          %401 = vsyncadd %s395, %s400
          %s402 = smul.addr %s28, 128
          %s403 = scalar_lea.hbm %s1, %s402
          %s405 = sshll.u32 %s398, 4
          %s406 = int_to_ptr.vmem [resolvable:$true] %s405
          %408 = dma.hbm_to_vmem [thread:$0]  %s403, 128, %s406, %s395
        $region56: #{tpu_custom_call.1} parent=47 // pred_fallthru
          _
        // Predicated region
        $region57: #{tpu_custom_call.1} parent=47 // pred_check
          %p409 = pneg %p100
        $region58: #{tpu_custom_call.1} parent=47 // pred_check_branch
          %411 = sbr.rel (%p409) target = $region60
        $region59: #{tpu_custom_call.1} parent=47 // pred_region
          %s412 = sand.u32 %s28, 1
          %s413 = scalar_lea.sflag [#allocation6], %s412
          %s414 = sand.u32 %s90, 1
          %s415 = smul.addr %s414, 8
          %s416 = scalar_lea.vmem [#allocation7], %s415
          %s418 = ssub.s32 128, 128
          %419 = vsyncadd %s413, %s418
          %s420 = smul.addr %s28, 128
          %s421 = scalar_lea.hbm %s2, %s420
          %s423 = sshll.u32 %s416, 4
          %s424 = int_to_ptr.vmem [resolvable:$true] %s423
          %426 = dma.hbm_to_vmem [thread:$0]  %s421, 128, %s424, %s413
        $region60: #{tpu_custom_call.1} parent=47 // pred_fallthru
          _
      $region48: #{tpu_custom_call.1} parent=5 // pred_fallthru
        _
      %p427 = scmp.le.s32.totalorder 1, %s28
      %p428 = scmp.lt.s32.totalorder %s28, 3
      %p429 = pnand %p427, %p428
      %p430 = pneg %p429
      // Predicated region
      $region61: #{tpu_custom_call.1} parent=5 // pred_check
        _
      $region62: #{tpu_custom_call.1} parent=5 // pred_check_branch
        %432 = sbr.rel (%p429) target = $region64
      $region63: #{tpu_custom_call.1} parent=5 // pred_region
        %s433 = ssub.s32 %s28, 1
        %s434 = sand.u32 %s41, 1
        %s435 = scalar_lea.sflag [#allocation3], %s434
        %s436 = sand.u32 %s41, 1
        %s437 = smul.addr %s436, 8
        %s438 = scalar_lea.vmem [#allocation2], %s437
        // Predicated region
        $region65: #{tpu_custom_call.1} parent=63 // pred_check
          %p439 = pneg %p54
        $region66: #{tpu_custom_call.1} parent=63 // pred_check_branch
          %441 = sbr.rel (%p439) target = $region68
        $region67: #{tpu_custom_call.1} parent=63 // pred_region
          %442 = dma.done %s435, 128
        $region68: #{tpu_custom_call.1} parent=63 // pred_fallthru
          _
        %s443 = sand.u32 %s33, 1
        %s444 = scalar_lea.sflag [#allocation6], %s443
        %s445 = sand.u32 %s67, 1
        %s446 = smul.addr %s445, 8
        %s447 = scalar_lea.vmem [#allocation5], %s446
        // Predicated region
        $region69: #{tpu_custom_call.1} parent=63 // pred_check
          %p448 = pneg %p80
        $region70: #{tpu_custom_call.1} parent=63 // pred_check_branch
          %450 = sbr.rel (%p448) target = $region72
        $region71: #{tpu_custom_call.1} parent=63 // pred_region
          %451 = dma.done %s444, 128
        $region72: #{tpu_custom_call.1} parent=63 // pred_fallthru
          _
        %s452 = sand.u32 %s33, 1
        %s453 = scalar_lea.sflag [#allocation6], %s452
        %s454 = sand.u32 %s93, 1
        %s455 = smul.addr %s454, 8
        %s456 = scalar_lea.vmem [#allocation7], %s455
        // Predicated region
        $region73: #{tpu_custom_call.1} parent=63 // pred_check
          %p457 = pneg %p106
        $region74: #{tpu_custom_call.1} parent=63 // pred_check_branch
          %459 = sbr.rel (%p457) target = $region76
        $region75: #{tpu_custom_call.1} parent=63 // pred_region
          %460 = dma.done %s453, 128
        $region76: #{tpu_custom_call.1} parent=63 // pred_fallthru
          _
        // Predicated region
        $region77: #{tpu_custom_call.1} parent=63 // pred_check
          %p461 = pneg %p127
        $region78: #{tpu_custom_call.1} parent=63 // pred_check_branch
          %463 = sbr.rel (%p461) target = $region80
        $region79: #{tpu_custom_call.1} parent=63 // pred_region
          %464 = dma.done [#allocation9], 512
        $region80: #{tpu_custom_call.1} parent=63 // pred_fallthru
          _
        // Predicated region
        $region81: #{tpu_custom_call.1} parent=63 // pred_check
          %p465 = pneg %p169
        $region82: #{tpu_custom_call.1} parent=63 // pred_check_branch
          %467 = sbr.rel (%p465) target = $region84
        $region83: #{tpu_custom_call.1} parent=63 // pred_region
          %468 = dma.done [#allocation9], 512
        $region84: #{tpu_custom_call.1} parent=63 // pred_fallthru
          _
        // Predicated region
        $region85: #{tpu_custom_call.1} parent=63 // pred_check
          %p469 = pneg %p211
        $region86: #{tpu_custom_call.1} parent=63 // pred_check_branch
          %471 = sbr.rel (%p469) target = $region88
        $region87: #{tpu_custom_call.1} parent=63 // pred_region
          %472 = dma.done [#allocation12], 512
        $region88: #{tpu_custom_call.1} parent=63 // pred_fallthru
          _
        %s473 = sand.u32 %s41, 1
        %s474 = scalar_lea.sflag [#allocation3], %s473
        %s475 = sand.u32 %s41, 1
        %s476 = smul.addr %s475, 8
        %s477 = scalar_lea.vmem [#allocation2], %s476
        %p478 = pneg %p54
        %p479 = pneg %p51
        %s480 = sand.u32 %s33, 1
        %s481 = scalar_lea.sflag [#allocation6], %s480
        %s482 = sand.u32 %s67, 1
        %s483 = smul.addr %s482, 8
        %s484 = scalar_lea.vmem [#allocation5], %s483
        %p485 = pneg %p80
        %p486 = pneg %p77
        %s487 = sand.u32 %s33, 1
        %s488 = scalar_lea.sflag [#allocation6], %s487
        %s489 = sand.u32 %s93, 1
        %s490 = smul.addr %s489, 8
        %s491 = scalar_lea.vmem [#allocation7], %s490
        %p492 = pneg %p106
        %p493 = pneg %p103
        %p494 = pneg %p127
        %p495 = pneg %p124
        %p496 = pneg %p148
        %p497 = pneg %p145
        %p498 = pneg %p169
        %p499 = pneg %p166
        %p500 = pneg %p190
        %p501 = pneg %p187
        %p502 = pneg %p211
        %p503 = pneg %p208
        %p504 = pneg %p232
        %p505 = pneg %p229
        %p506 = pneg %p253
        %p507 = pneg %p250
        %p508 = pneg %p274
        %p509 = pneg %p271
        %p510 = pneg %p300
        %p511 = pneg %p297
        %s512 = sand.u32 %s287, 1
        %s513 = scalar_lea.sflag [#allocation4], %s512
        %s514 = sand.u32 %s287, 1
        %s515 = smul.addr %s514, 8
        %s516 = scalar_lea.vmem [#allocation13], %s515
        %v517 = vld [vmem:[%s438] sm:$0xff]
        %v518 = vld [vmem:[%s447] sm:$0xff]
        %v519 = vld [vmem:[%s456] sm:$0xff]
        %v520 = vld [vmem:[#allocation8] sm:$0xff]
        %v521 = vld [vmem:[#allocation8 + $0x8] sm:$0xff]
        %v522 = vld [vmem:[#allocation8 + $0x10] sm:$0xff]
        %v523 = vld [vmem:[#allocation8 + $0x18] sm:$0xff]
        %v524 = vld [vmem:[%s4] sm:$0x1]
        %v526 = vlaneseq
        %v527 = vshrl.u32 %v526, 7
        %v528 = vsub.s32 0, %v527
        %v529 = vrot.slane %v524, %v528
        %vm531 = vcmask 261120
        %v533 = vsel %vm531, %v517, 0
        %535 = vmatprep.subr.mxu0 0.0
        %536 = vmatpush1.msra.mxu0 %v520
        %537 = vmatprep.subr.mxu0 0.0
        %538 = vmatpush1.msra.mxu0 %v521
        %539 = vmatprep.subr.mxu0 0.0
        %540 = vmatpush1.msra.mxu0 %v522
        %541 = vmatprep.subr.mxu0 0.0
        %542 = vmatpush1.msra.mxu0 %v523
        %543 = vmatprep.subr.mxu0 0.0
        %544 = vmatpush1.msra.mxu0 0.0
        %545 = vmatprep.subr.mxu0 0.0
        %546 = vmatpush1.msra.mxu0 0.0
        %547 = vmatprep.subr.mxu0 0.0
        %548 = vmatpush1.msra.mxu0 0.0
        %549 = vmatprep.subr.mxu0 0.0
        %550 = vmatpush1.msra.mxu0 0.0
        %551 = vmatprep.subr.mxu0 0.0
        %552 = vmatpush1.msra.mxu0 0.0
        %553 = vmatprep.subr.mxu0 0.0
        %554 = vmatpush1.msra.mxu0 0.0
        %555 = vmatprep.subr.mxu0 0.0
        %556 = vmatpush1.msra.mxu0 0.0
        %557 = vmatprep.subr.mxu0 0.0
        %558 = vmatpush1.msra.mxu0 0.0
        %559 = vmatprep.subr.mxu0 0.0
        %560 = vmatpush1.msra.mxu0 0.0
        %561 = vmatprep.subr.mxu0 0.0
        %562 = vmatpush1.msra.mxu0 0.0
        %563 = vmatprep.subr.mxu0 0.0
        %564 = vmatpush1.msra.mxu0 0.0
        %565 = vmatprep.subr.mxu0 0.0
        %566 = vmatpush1.msra.mxu0 0.0
        %567 = vmatprep.subr.mxu0 0.0
        %568 = vmatpush1.msra.mxu0 0.0
        %569 = vmatprep.subr.mxu0 0.0
        %570 = vmatpush1.msra.mxu0 0.0
        %571 = vmatprep.subr.mxu0 0.0
        %572 = vmatpush1.msra.mxu0 0.0
        %573 = vmatprep.subr.mxu0 0.0
        %574 = vmatpush1.msra.mxu0 0.0
        %575 = vmatprep.subr.mxu0 0.0
        %576 = vmatpush1.msra.mxu0 0.0
        %577 = vmatprep.subr.mxu0 0.0
        %578 = vmatpush1.msra.mxu0 0.0
        %579 = vmatprep.subr.mxu0 0.0
        %580 = vmatpush1.msra.mxu0 0.0
        %581 = vmatprep.subr.mxu0 0.0
        %582 = vmatpush1.msra.mxu0 0.0
        %583 = vmatprep.subr.mxu0 0.0
        %584 = vmatpush1.msra.mxu0 0.0
        %585 = vmatprep.subr.mxu0 0.0
        %586 = vmatpush1.msra.mxu0 0.0
        %587 = vmatprep.subr.mxu0 0.0
        %588 = vmatpush1.msra.mxu0 0.0
        %589 = vmatprep.subr.mxu0 0.0
        %590 = vmatpush1.msra.mxu0 0.0
        %591 = vmatprep.subr.mxu0 0.0
        %592 = vmatpush1.msra.mxu0 0.0
        %593 = vmatprep.subr.mxu0 0.0
        %594 = vmatpush1.msra.mxu0 0.0
        %595 = vmatprep.subr.mxu0 0.0
        %596 = vmatpush1.msra.mxu0 0.0
        %597 = vmatprep.subr.mxu0 0.0
        %598 = vmatpush1.msra.mxu0 0.0
        %599 = vmatprep.mubr.f32.mxu0 0.0
        %600 = vmatmul.mubr.f32.gmra.mrb[0].mxu0 %v533
        %v601 = vpop.f32.mrb[0].mxu0
        %v602 = vadd.f32 %v529, %v601
        %v603 = vpop.f32.mrb[0].mxu0
        %604 = vdwg.mxu0
        %v605 = vld [vmem:[#allocation10] sm:$0xff]
        %v606 = vld [vmem:[#allocation10 + $0x8] sm:$0xff]
        %v607 = vld [vmem:[#allocation10 + $0x10] sm:$0xff]
        %v608 = vld [vmem:[#allocation10 + $0x18] sm:$0xff]
        %v609 = vld [vmem:[%s6] sm:$0x1]
        %v611 = vlaneseq
        %v612 = vshrl.u32 %v611, 7
        %v613 = vsub.s32 0, %v612
        %v614 = vrot.slane %v609, %v613
        %v617 = vsel %vm531, %v518, 0
        %619 = vmatprep.subr.mxu0 0.0
        %620 = vmatpush1.msra.mxu0 %v605
        %621 = vmatprep.subr.mxu0 0.0
        %622 = vmatpush1.msra.mxu0 %v606
        %623 = vmatprep.subr.mxu0 0.0
        %624 = vmatpush1.msra.mxu0 %v607
        %625 = vmatprep.subr.mxu0 0.0
        %626 = vmatpush1.msra.mxu0 %v608
        %627 = vmatprep.subr.mxu0 0.0
        %628 = vmatpush1.msra.mxu0 0.0
        %629 = vmatprep.subr.mxu0 0.0
        %630 = vmatpush1.msra.mxu0 0.0
        %631 = vmatprep.subr.mxu0 0.0
        %632 = vmatpush1.msra.mxu0 0.0
        %633 = vmatprep.subr.mxu0 0.0
        %634 = vmatpush1.msra.mxu0 0.0
        %635 = vmatprep.subr.mxu0 0.0
        %636 = vmatpush1.msra.mxu0 0.0
        %637 = vmatprep.subr.mxu0 0.0
        %638 = vmatpush1.msra.mxu0 0.0
        %639 = vmatprep.subr.mxu0 0.0
        %640 = vmatpush1.msra.mxu0 0.0
        %641 = vmatprep.subr.mxu0 0.0
        %642 = vmatpush1.msra.mxu0 0.0
        %643 = vmatprep.subr.mxu0 0.0
        %644 = vmatpush1.msra.mxu0 0.0
        %645 = vmatprep.subr.mxu0 0.0
        %646 = vmatpush1.msra.mxu0 0.0
        %647 = vmatprep.subr.mxu0 0.0
        %648 = vmatpush1.msra.mxu0 0.0
        %649 = vmatprep.subr.mxu0 0.0
        %650 = vmatpush1.msra.mxu0 0.0
        %651 = vmatprep.subr.mxu0 0.0
        %652 = vmatpush1.msra.mxu0 0.0
        %653 = vmatprep.subr.mxu0 0.0
        %654 = vmatpush1.msra.mxu0 0.0
        %655 = vmatprep.subr.mxu0 0.0
        %656 = vmatpush1.msra.mxu0 0.0
        %657 = vmatprep.subr.mxu0 0.0
        %658 = vmatpush1.msra.mxu0 0.0
        %659 = vmatprep.subr.mxu0 0.0
        %660 = vmatpush1.msra.mxu0 0.0
        %661 = vmatprep.subr.mxu0 0.0
        %662 = vmatpush1.msra.mxu0 0.0
        %663 = vmatprep.subr.mxu0 0.0
        %664 = vmatpush1.msra.mxu0 0.0
        %665 = vmatprep.subr.mxu0 0.0
        %666 = vmatpush1.msra.mxu0 0.0
        %667 = vmatprep.subr.mxu0 0.0
        %668 = vmatpush1.msra.mxu0 0.0
        %669 = vmatprep.subr.mxu0 0.0
        %670 = vmatpush1.msra.mxu0 0.0
        %671 = vmatprep.subr.mxu0 0.0
        %672 = vmatpush1.msra.mxu0 0.0
        %673 = vmatprep.subr.mxu0 0.0
        %674 = vmatpush1.msra.mxu0 0.0
        %675 = vmatprep.subr.mxu0 0.0
        %676 = vmatpush1.msra.mxu0 0.0
        %677 = vmatprep.subr.mxu0 0.0
        %678 = vmatpush1.msra.mxu0 0.0
        %679 = vmatprep.subr.mxu0 0.0
        %680 = vmatpush1.msra.mxu0 0.0
        %681 = vmatprep.subr.mxu0 0.0
        %682 = vmatpush1.msra.mxu0 0.0
        %683 = vmatprep.mubr.f32.mxu0 0.0
        %684 = vmatmul.mubr.f32.gmra.mrb[0].mxu0 %v617
        %v685 = vpop.f32.mrb[0].mxu0
        %v686 = vadd.f32 %v614, %v685
        %v687 = vpop.f32.mrb[0].mxu0
        %688 = vdwg.mxu0
        %v689 = vld [vmem:[#allocation11] sm:$0xff]
        %v690 = vld [vmem:[#allocation11 + $0x8] sm:$0xff]
        %v691 = vld [vmem:[#allocation11 + $0x10] sm:$0xff]
        %v692 = vld [vmem:[#allocation11 + $0x18] sm:$0xff]
        %vm693 = vcmask 64512
        %v695 = vsel %vm693, %v602, 0
        %v698 = vsel %vm693, %v686, 0
        %700 = vmatprep.subr.mxu0 0.0
        %701 = vmatpush1.xpose.msra.mxu0 %v698
        %702 = vmatprep.subr.mxu0 0.0
        %703 = vmatpush1.xpose.msra.mxu0 0.0
        %704 = vmatprep.subr.mxu0 0.0
        %705 = vmatpush1.xpose.msra.mxu0 0.0
        %706 = vmatprep.subr.mxu0 0.0
        %707 = vmatpush1.xpose.msra.mxu0 0.0
        %708 = vmatprep.subr.mxu0 0.0
        %709 = vmatpush1.xpose.msra.mxu0 0.0
        %710 = vmatprep.subr.mxu0 0.0
        %711 = vmatpush1.xpose.msra.mxu0 0.0
        %712 = vmatprep.subr.mxu0 0.0
        %713 = vmatpush1.xpose.msra.mxu0 0.0
        %714 = vmatprep.subr.mxu0 0.0
        %715 = vmatpush1.xpose.msra.mxu0 0.0
        %716 = vmatprep.subr.mxu0 0.0
        %717 = vmatpush1.xpose.msra.mxu0 0.0
        %718 = vmatprep.subr.mxu0 0.0
        %719 = vmatpush1.xpose.msra.mxu0 0.0
        %720 = vmatprep.subr.mxu0 0.0
        %721 = vmatpush1.xpose.msra.mxu0 0.0
        %722 = vmatprep.subr.mxu0 0.0
        %723 = vmatpush1.xpose.msra.mxu0 0.0
        %724 = vmatprep.subr.mxu0 0.0
        %725 = vmatpush1.xpose.msra.mxu0 0.0
        %726 = vmatprep.subr.mxu0 0.0
        %727 = vmatpush1.xpose.msra.mxu0 0.0
        %728 = vmatprep.subr.mxu0 0.0
        %729 = vmatpush1.xpose.msra.mxu0 0.0
        %730 = vmatprep.subr.mxu0 0.0
        %731 = vmatpush1.xpose.msra.mxu0 0.0
        %732 = vmatprep.subr.mxu0 0.0
        %733 = vmatpush1.xpose.msra.mxu0 0.0
        %734 = vmatprep.subr.mxu0 0.0
        %735 = vmatpush1.xpose.msra.mxu0 0.0
        %736 = vmatprep.subr.mxu0 0.0
        %737 = vmatpush1.xpose.msra.mxu0 0.0
        %738 = vmatprep.subr.mxu0 0.0
        %739 = vmatpush1.xpose.msra.mxu0 0.0
        %740 = vmatprep.subr.mxu0 0.0
        %741 = vmatpush1.xpose.msra.mxu0 0.0
        %742 = vmatprep.subr.mxu0 0.0
        %743 = vmatpush1.xpose.msra.mxu0 0.0
        %744 = vmatprep.subr.mxu0 0.0
        %745 = vmatpush1.xpose.msra.mxu0 0.0
        %746 = vmatprep.subr.mxu0 0.0
        %747 = vmatpush1.xpose.msra.mxu0 0.0
        %748 = vmatprep.subr.mxu0 0.0
        %749 = vmatpush1.xpose.msra.mxu0 0.0
        %750 = vmatprep.subr.mxu0 0.0
        %751 = vmatpush1.xpose.msra.mxu0 0.0
        %752 = vmatprep.subr.mxu0 0.0
        %753 = vmatpush1.xpose.msra.mxu0 0.0
        %754 = vmatprep.subr.mxu0 0.0
        %755 = vmatpush1.xpose.msra.mxu0 0.0
        %756 = vmatprep.subr.mxu0 0.0
        %757 = vmatpush1.xpose.msra.mxu0 0.0
        %758 = vmatprep.subr.mxu0 0.0
        %759 = vmatpush1.xpose.msra.mxu0 0.0
        %760 = vmatprep.subr.mxu0 0.0
        %761 = vmatpush1.xpose.msra.mxu0 0.0
        %762 = vmatprep.subr.mxu0 0.0
        %763 = vmatpush1.xpose.msra.mxu0 0.0
        %764 = vmatprep.mubr.f32.mxu0 0.0
        %765 = vmatmul.mubr.f32.gmra.mrb[0].mxu0 %v695
        %v766 = vpop.f32.mrb[0].mxu0
        %v767 = vadd.f32 0.0, %v766
        %v768 = vpop.f32.mrb[0].mxu0
        %769 = vdwg.mxu0
        %v770 = vmul.f32 %v767, 0.35355338
        %v771 = vadd.f32 %v770, %v519
        %v772 = vsel %vm693, %v771, -inf
        %773 = vmax.xlane.f32.xlu0 %v772
        %v774 = vpop.xlane.xlu0 %773
        %v775 = vsub.f32 %v771, %v774
        %v776 = vmul.f32 %v775, 1.442695
        %v777 = vpow.pop %v776
        %v778 = vsel %vm693, %v777, 0.0
        %779 = vadd.xlane.f32.xlu0 %v778
        %v780 = vpop.xlane.xlu0 %779
        %v781 = vrcp.pop %v780
        %v782 = vmul.f32 %v777, %v781
        %783 = vrot.lane.b32.xlu0 %v686, 96
        %v784 = vpop.permute.xlu0 %783
        %v787 = vsel %vm693, %v782, 0
        %789 = vmatprep.subr.mxu0 0.0
        %790 = vmatpush1.msra.mxu0 %v784
        %791 = vmatprep.subr.mxu0 0.0
        %792 = vmatpush1.msra.mxu0 0.0
        %793 = vmatprep.subr.mxu0 0.0
        %794 = vmatpush1.msra.mxu0 0.0
        %795 = vmatprep.subr.mxu0 0.0
        %796 = vmatpush1.msra.mxu0 0.0
        %797 = vmatprep.subr.mxu0 0.0
        %798 = vmatpush1.msra.mxu0 0.0
        %799 = vmatprep.subr.mxu0 0.0
        %800 = vmatpush1.msra.mxu0 0.0
        %801 = vmatprep.subr.mxu0 0.0
        %802 = vmatpush1.msra.mxu0 0.0
        %803 = vmatprep.subr.mxu0 0.0
        %804 = vmatpush1.msra.mxu0 0.0
        %805 = vmatprep.subr.mxu0 0.0
        %806 = vmatpush1.msra.mxu0 0.0
        %807 = vmatprep.subr.mxu0 0.0
        %808 = vmatpush1.msra.mxu0 0.0
        %809 = vmatprep.subr.mxu0 0.0
        %810 = vmatpush1.msra.mxu0 0.0
        %811 = vmatprep.subr.mxu0 0.0
        %812 = vmatpush1.msra.mxu0 0.0
        %813 = vmatprep.subr.mxu0 0.0
        %814 = vmatpush1.msra.mxu0 0.0
        %815 = vmatprep.subr.mxu0 0.0
        %816 = vmatpush1.msra.mxu0 0.0
        %817 = vmatprep.subr.mxu0 0.0
        %818 = vmatpush1.msra.mxu0 0.0
        %819 = vmatprep.subr.mxu0 0.0
        %820 = vmatpush1.msra.mxu0 0.0
        %821 = vmatprep.subr.mxu0 0.0
        %822 = vmatpush1.msra.mxu0 0.0
        %823 = vmatprep.subr.mxu0 0.0
        %824 = vmatpush1.msra.mxu0 0.0
        %825 = vmatprep.subr.mxu0 0.0
        %826 = vmatpush1.msra.mxu0 0.0
        %827 = vmatprep.subr.mxu0 0.0
        %828 = vmatpush1.msra.mxu0 0.0
        %829 = vmatprep.subr.mxu0 0.0
        %830 = vmatpush1.msra.mxu0 0.0
        %831 = vmatprep.subr.mxu0 0.0
        %832 = vmatpush1.msra.mxu0 0.0
        %833 = vmatprep.subr.mxu0 0.0
        %834 = vmatpush1.msra.mxu0 0.0
        %835 = vmatprep.subr.mxu0 0.0
        %836 = vmatpush1.msra.mxu0 0.0
        %837 = vmatprep.subr.mxu0 0.0
        %838 = vmatpush1.msra.mxu0 0.0
        %839 = vmatprep.subr.mxu0 0.0
        %840 = vmatpush1.msra.mxu0 0.0
        %841 = vmatprep.subr.mxu0 0.0
        %842 = vmatpush1.msra.mxu0 0.0
        %843 = vmatprep.subr.mxu0 0.0
        %844 = vmatpush1.msra.mxu0 0.0
        %845 = vmatprep.subr.mxu0 0.0
        %846 = vmatpush1.msra.mxu0 0.0
        %847 = vmatprep.subr.mxu0 0.0
        %848 = vmatpush1.msra.mxu0 0.0
        %849 = vmatprep.subr.mxu0 0.0
        %850 = vmatpush1.msra.mxu0 0.0
        %851 = vmatprep.subr.mxu0 0.0
        %852 = vmatpush1.msra.mxu0 0.0
        %853 = vmatprep.mubr.f32.mxu0 0.0
        %854 = vmatmul.mubr.f32.gmra.mrb[0].mxu0 %v787
        %v855 = vpop.f32.mrb[0].mxu0
        %v856 = vadd.f32 0.0, %v855
        %v857 = vpop.f32.mrb[0].mxu0
        %858 = vdwg.mxu0
        %859 = vrot.lane.b32.xlu0 %v602, 120
        %v860 = vpop.permute.xlu0 %859
        %861 = vrot.lane.b32.xlu0 %v686, 120
        %v862 = vpop.permute.xlu0 %861
        %v863 = vsel %vm693, %v860, 0
        %v865 = vsel %vm693, %v862, 0
        %867 = vmatprep.subr.mxu0 0.0
        %868 = vmatpush1.xpose.msra.mxu0 %v865
        %869 = vmatprep.subr.mxu0 0.0
        %870 = vmatpush1.xpose.msra.mxu0 0.0
        %871 = vmatprep.subr.mxu0 0.0
        %872 = vmatpush1.xpose.msra.mxu0 0.0
        %873 = vmatprep.subr.mxu0 0.0
        %874 = vmatpush1.xpose.msra.mxu0 0.0
        %875 = vmatprep.subr.mxu0 0.0
        %876 = vmatpush1.xpose.msra.mxu0 0.0
        %877 = vmatprep.subr.mxu0 0.0
        %878 = vmatpush1.xpose.msra.mxu0 0.0
        %879 = vmatprep.subr.mxu0 0.0
        %880 = vmatpush1.xpose.msra.mxu0 0.0
        %881 = vmatprep.subr.mxu0 0.0
        %882 = vmatpush1.xpose.msra.mxu0 0.0
        %883 = vmatprep.subr.mxu0 0.0
        %884 = vmatpush1.xpose.msra.mxu0 0.0
        %885 = vmatprep.subr.mxu0 0.0
        %886 = vmatpush1.xpose.msra.mxu0 0.0
        %887 = vmatprep.subr.mxu0 0.0
        %888 = vmatpush1.xpose.msra.mxu0 0.0
        %889 = vmatprep.subr.mxu0 0.0
        %890 = vmatpush1.xpose.msra.mxu0 0.0
        %891 = vmatprep.subr.mxu0 0.0
        %892 = vmatpush1.xpose.msra.mxu0 0.0
        %893 = vmatprep.subr.mxu0 0.0
        %894 = vmatpush1.xpose.msra.mxu0 0.0
        %895 = vmatprep.subr.mxu0 0.0
        %896 = vmatpush1.xpose.msra.mxu0 0.0
        %897 = vmatprep.subr.mxu0 0.0
        %898 = vmatpush1.xpose.msra.mxu0 0.0
        %899 = vmatprep.subr.mxu0 0.0
        %900 = vmatpush1.xpose.msra.mxu0 0.0
        %901 = vmatprep.subr.mxu0 0.0
        %902 = vmatpush1.xpose.msra.mxu0 0.0
        %903 = vmatprep.subr.mxu0 0.0
        %904 = vmatpush1.xpose.msra.mxu0 0.0
        %905 = vmatprep.subr.mxu0 0.0
        %906 = vmatpush1.xpose.msra.mxu0 0.0
        %907 = vmatprep.subr.mxu0 0.0
        %908 = vmatpush1.xpose.msra.mxu0 0.0
        %909 = vmatprep.subr.mxu0 0.0
        %910 = vmatpush1.xpose.msra.mxu0 0.0
        %911 = vmatprep.subr.mxu0 0.0
        %912 = vmatpush1.xpose.msra.mxu0 0.0
        %913 = vmatprep.subr.mxu0 0.0
        %914 = vmatpush1.xpose.msra.mxu0 0.0
        %915 = vmatprep.subr.mxu0 0.0
        %916 = vmatpush1.xpose.msra.mxu0 0.0
        %917 = vmatprep.subr.mxu0 0.0
        %918 = vmatpush1.xpose.msra.mxu0 0.0
        %919 = vmatprep.subr.mxu0 0.0
        %920 = vmatpush1.xpose.msra.mxu0 0.0
        %921 = vmatprep.subr.mxu0 0.0
        %922 = vmatpush1.xpose.msra.mxu0 0.0
        %923 = vmatprep.subr.mxu0 0.0
        %924 = vmatpush1.xpose.msra.mxu0 0.0
        %925 = vmatprep.subr.mxu0 0.0
        %926 = vmatpush1.xpose.msra.mxu0 0.0
        %927 = vmatprep.subr.mxu0 0.0
        %928 = vmatpush1.xpose.msra.mxu0 0.0
        %929 = vmatprep.subr.mxu0 0.0
        %930 = vmatpush1.xpose.msra.mxu0 0.0
        %931 = vmatprep.mubr.f32.mxu0 0.0
        %932 = vmatmul.mubr.f32.gmra.mrb[0].mxu0 %v863
        %v933 = vpop.f32.mrb[0].mxu0
        %v934 = vadd.f32 0.0, %v933
        %v935 = vpop.f32.mrb[0].mxu0
        %936 = vdwg.mxu0
        %v937 = vmul.f32 %v934, 0.35355338
        %v938 = vadd.f32 %v937, %v519
        %v939 = vsel %vm693, %v938, -inf
        %940 = vmax.xlane.f32.xlu0 %v939
        %v941 = vpop.xlane.xlu0 %940
        %v942 = vsub.f32 %v938, %v941
        %v943 = vmul.f32 %v942, 1.442695
        %v944 = vpow.pop %v943
        %v945 = vsel %vm693, %v944, 0.0
        %946 = vadd.xlane.f32.xlu0 %v945
        %v947 = vpop.xlane.xlu0 %946
        %v948 = vrcp.pop %v947
        %v949 = vmul.f32 %v944, %v948
        %950 = vrot.lane.b32.xlu0 %v686, 88
        %v951 = vpop.permute.xlu0 %950
        %v954 = vsel %vm693, %v949, 0
        %956 = vmatprep.subr.mxu0 0.0
        %957 = vmatpush1.msra.mxu0 %v951
        %958 = vmatprep.subr.mxu0 0.0
        %959 = vmatpush1.msra.mxu0 0.0
        %960 = vmatprep.subr.mxu0 0.0
        %961 = vmatpush1.msra.mxu0 0.0
        %962 = vmatprep.subr.mxu0 0.0
        %963 = vmatpush1.msra.mxu0 0.0
        %964 = vmatprep.subr.mxu0 0.0
        %965 = vmatpush1.msra.mxu0 0.0
        %966 = vmatprep.subr.mxu0 0.0
        %967 = vmatpush1.msra.mxu0 0.0
        %968 = vmatprep.subr.mxu0 0.0
        %969 = vmatpush1.msra.mxu0 0.0
        %970 = vmatprep.subr.mxu0 0.0
        %971 = vmatpush1.msra.mxu0 0.0
        %972 = vmatprep.subr.mxu0 0.0
        %973 = vmatpush1.msra.mxu0 0.0
        %974 = vmatprep.subr.mxu0 0.0
        %975 = vmatpush1.msra.mxu0 0.0
        %976 = vmatprep.subr.mxu0 0.0
        %977 = vmatpush1.msra.mxu0 0.0
        %978 = vmatprep.subr.mxu0 0.0
        %979 = vmatpush1.msra.mxu0 0.0
        %980 = vmatprep.subr.mxu0 0.0
        %981 = vmatpush1.msra.mxu0 0.0
        %982 = vmatprep.subr.mxu0 0.0
        %983 = vmatpush1.msra.mxu0 0.0
        %984 = vmatprep.subr.mxu0 0.0
        %985 = vmatpush1.msra.mxu0 0.0
        %986 = vmatprep.subr.mxu0 0.0
        %987 = vmatpush1.msra.mxu0 0.0
        %988 = vmatprep.subr.mxu0 0.0
        %989 = vmatpush1.msra.mxu0 0.0
        %990 = vmatprep.subr.mxu0 0.0
        %991 = vmatpush1.msra.mxu0 0.0
        %992 = vmatprep.subr.mxu0 0.0
        %993 = vmatpush1.msra.mxu0 0.0
        %994 = vmatprep.subr.mxu0 0.0
        %995 = vmatpush1.msra.mxu0 0.0
        %996 = vmatprep.subr.mxu0 0.0
        %997 = vmatpush1.msra.mxu0 0.0
        %998 = vmatprep.subr.mxu0 0.0
        %999 = vmatpush1.msra.mxu0 0.0
        %1000 = vmatprep.subr.mxu0 0.0
        %1001 = vmatpush1.msra.mxu0 0.0
        %1002 = vmatprep.subr.mxu0 0.0
        %1003 = vmatpush1.msra.mxu0 0.0
        %1004 = vmatprep.subr.mxu0 0.0
        %1005 = vmatpush1.msra.mxu0 0.0
        %1006 = vmatprep.subr.mxu0 0.0
        %1007 = vmatpush1.msra.mxu0 0.0
        %1008 = vmatprep.subr.mxu0 0.0
        %1009 = vmatpush1.msra.mxu0 0.0
        %1010 = vmatprep.subr.mxu0 0.0
        %1011 = vmatpush1.msra.mxu0 0.0
        %1012 = vmatprep.subr.mxu0 0.0
        %1013 = vmatpush1.msra.mxu0 0.0
        %1014 = vmatprep.subr.mxu0 0.0
        %1015 = vmatpush1.msra.mxu0 0.0
        %1016 = vmatprep.subr.mxu0 0.0
        %1017 = vmatpush1.msra.mxu0 0.0
        %1018 = vmatprep.subr.mxu0 0.0
        %1019 = vmatpush1.msra.mxu0 0.0
        %1020 = vmatprep.mubr.f32.mxu0 0.0
        %1021 = vmatmul.mubr.f32.gmra.mrb[0].mxu0 %v954
        %v1022 = vpop.f32.mrb[0].mxu0
        %v1023 = vadd.f32 0.0, %v1022
        %v1024 = vpop.f32.mrb[0].mxu0
        %1025 = vdwg.mxu0
        %v1027 = vsel %vm693, %v1023, 0
        %1029 = vmatprep.subr.mxu0 0.0
        %1030 = vmatpush1.msra.mxu0 %v690
        %1031 = vmatprep.subr.mxu0 0.0
        %1032 = vmatpush1.msra.mxu0 0.0
        %1033 = vmatprep.subr.mxu0 0.0
        %1034 = vmatpush1.msra.mxu0 0.0
        %1035 = vmatprep.subr.mxu0 0.0
        %1036 = vmatpush1.msra.mxu0 0.0
        %1037 = vmatprep.subr.mxu0 0.0
        %1038 = vmatpush1.msra.mxu0 0.0
        %1039 = vmatprep.subr.mxu0 0.0
        %1040 = vmatpush1.msra.mxu0 0.0
        %1041 = vmatprep.subr.mxu0 0.0
        %1042 = vmatpush1.msra.mxu0 0.0
        %1043 = vmatprep.subr.mxu0 0.0
        %1044 = vmatpush1.msra.mxu0 0.0
        %1045 = vmatprep.subr.mxu0 0.0
        %1046 = vmatpush1.msra.mxu0 0.0
        %1047 = vmatprep.subr.mxu0 0.0
        %1048 = vmatpush1.msra.mxu0 0.0
        %1049 = vmatprep.subr.mxu0 0.0
        %1050 = vmatpush1.msra.mxu0 0.0
        %1051 = vmatprep.subr.mxu0 0.0
        %1052 = vmatpush1.msra.mxu0 0.0
        %1053 = vmatprep.subr.mxu0 0.0
        %1054 = vmatpush1.msra.mxu0 0.0
        %1055 = vmatprep.subr.mxu0 0.0
        %1056 = vmatpush1.msra.mxu0 0.0
        %1057 = vmatprep.subr.mxu0 0.0
        %1058 = vmatpush1.msra.mxu0 0.0
        %1059 = vmatprep.subr.mxu0 0.0
        %1060 = vmatpush1.msra.mxu0 0.0
        %1061 = vmatprep.subr.mxu0 0.0
        %1062 = vmatpush1.msra.mxu0 0.0
        %1063 = vmatprep.subr.mxu0 0.0
        %1064 = vmatpush1.msra.mxu0 0.0
        %1065 = vmatprep.subr.mxu0 0.0
        %1066 = vmatpush1.msra.mxu0 0.0
        %1067 = vmatprep.subr.mxu0 0.0
        %1068 = vmatpush1.msra.mxu0 0.0
        %1069 = vmatprep.subr.mxu0 0.0
        %1070 = vmatpush1.msra.mxu0 0.0
        %1071 = vmatprep.subr.mxu0 0.0
        %1072 = vmatpush1.msra.mxu0 0.0
        %1073 = vmatprep.subr.mxu0 0.0
        %1074 = vmatpush1.msra.mxu0 0.0
        %1075 = vmatprep.subr.mxu0 0.0
        %1076 = vmatpush1.msra.mxu0 0.0
        %1077 = vmatprep.subr.mxu0 0.0
        %1078 = vmatpush1.msra.mxu0 0.0
        %1079 = vmatprep.subr.mxu0 0.0
        %1080 = vmatpush1.msra.mxu0 0.0
        %1081 = vmatprep.subr.mxu0 0.0
        %1082 = vmatpush1.msra.mxu0 0.0
        %1083 = vmatprep.subr.mxu0 0.0
        %1084 = vmatpush1.msra.mxu0 0.0
        %1085 = vmatprep.subr.mxu0 0.0
        %1086 = vmatpush1.msra.mxu0 0.0
        %1087 = vmatprep.subr.mxu0 0.0
        %1088 = vmatpush1.msra.mxu0 0.0
        %1089 = vmatprep.subr.mxu0 0.0
        %1090 = vmatpush1.msra.mxu0 0.0
        %1091 = vmatprep.subr.mxu0 0.0
        %1092 = vmatpush1.msra.mxu0 0.0
        %1093 = vmatprep.mubr.f32.mxu0 0.0
        %1094 = vmatmul.mubr.f32.gmra.mrb[0].mxu0 %v1027
        %v1095 = vpop.f32.mrb[0].mxu0
        %v1096 = vadd.f32 0.0, %v1095
        %v1097 = vpop.f32.mrb[0].mxu0
        %1098 = vdwg.mxu0
        %v1100 = vsel %vm693, %v856, 0
        %1102 = vmatprep.subr.mxu0 0.0
        %1103 = vmatpush1.msra.mxu0 %v689
        %1104 = vmatprep.subr.mxu0 0.0
        %1105 = vmatpush1.msra.mxu0 0.0
        %1106 = vmatprep.subr.mxu0 0.0
        %1107 = vmatpush1.msra.mxu0 0.0
        %1108 = vmatprep.subr.mxu0 0.0
        %1109 = vmatpush1.msra.mxu0 0.0
        %1110 = vmatprep.subr.mxu0 0.0
        %1111 = vmatpush1.msra.mxu0 0.0
        %1112 = vmatprep.subr.mxu0 0.0
        %1113 = vmatpush1.msra.mxu0 0.0
        %1114 = vmatprep.subr.mxu0 0.0
        %1115 = vmatpush1.msra.mxu0 0.0
        %1116 = vmatprep.subr.mxu0 0.0
        %1117 = vmatpush1.msra.mxu0 0.0
        %1118 = vmatprep.subr.mxu0 0.0
        %1119 = vmatpush1.msra.mxu0 0.0
        %1120 = vmatprep.subr.mxu0 0.0
        %1121 = vmatpush1.msra.mxu0 0.0
        %1122 = vmatprep.subr.mxu0 0.0
        %1123 = vmatpush1.msra.mxu0 0.0
        %1124 = vmatprep.subr.mxu0 0.0
        %1125 = vmatpush1.msra.mxu0 0.0
        %1126 = vmatprep.subr.mxu0 0.0
        %1127 = vmatpush1.msra.mxu0 0.0
        %1128 = vmatprep.subr.mxu0 0.0
        %1129 = vmatpush1.msra.mxu0 0.0
        %1130 = vmatprep.subr.mxu0 0.0
        %1131 = vmatpush1.msra.mxu0 0.0
        %1132 = vmatprep.subr.mxu0 0.0
        %1133 = vmatpush1.msra.mxu0 0.0
        %1134 = vmatprep.subr.mxu0 0.0
        %1135 = vmatpush1.msra.mxu0 0.0
        %1136 = vmatprep.subr.mxu0 0.0
        %1137 = vmatpush1.msra.mxu0 0.0
        %1138 = vmatprep.subr.mxu0 0.0
        %1139 = vmatpush1.msra.mxu0 0.0
        %1140 = vmatprep.subr.mxu0 0.0
        %1141 = vmatpush1.msra.mxu0 0.0
        %1142 = vmatprep.subr.mxu0 0.0
        %1143 = vmatpush1.msra.mxu0 0.0
        %1144 = vmatprep.subr.mxu0 0.0
        %1145 = vmatpush1.msra.mxu0 0.0
        %1146 = vmatprep.subr.mxu0 0.0
        %1147 = vmatpush1.msra.mxu0 0.0
        %1148 = vmatprep.subr.mxu0 0.0
        %1149 = vmatpush1.msra.mxu0 0.0
        %1150 = vmatprep.subr.mxu0 0.0
        %1151 = vmatpush1.msra.mxu0 0.0
        %1152 = vmatprep.subr.mxu0 0.0
        %1153 = vmatpush1.msra.mxu0 0.0
        %1154 = vmatprep.subr.mxu0 0.0
        %1155 = vmatpush1.msra.mxu0 0.0
        %1156 = vmatprep.subr.mxu0 0.0
        %1157 = vmatpush1.msra.mxu0 0.0
        %1158 = vmatprep.subr.mxu0 0.0
        %1159 = vmatpush1.msra.mxu0 0.0
        %1160 = vmatprep.subr.mxu0 0.0
        %1161 = vmatpush1.msra.mxu0 0.0
        %1162 = vmatprep.subr.mxu0 0.0
        %1163 = vmatpush1.msra.mxu0 0.0
        %1164 = vmatprep.subr.mxu0 0.0
        %1165 = vmatpush1.msra.mxu0 0.0
        %1166 = vmatprep.mubr.f32.mxu0 0.0
        %1167 = vmatmul.mubr.f32.gmra.mrb[0].mxu0 %v1100
        %v1168 = vpop.f32.mrb[0].mxu0
        %v1169 = vadd.f32 %v1096, %v1168
        %v1170 = vpop.f32.mrb[0].mxu0
        %1171 = vdwg.mxu0
        %1172 = vrot.lane.b32.xlu0 %v602, 112
        %v1173 = vpop.permute.xlu0 %1172
        %1174 = vrot.lane.b32.xlu0 %v686, 112
        %v1175 = vpop.permute.xlu0 %1174
        %v1176 = vsel %vm693, %v1173, 0
        %v1178 = vsel %vm693, %v1175, 0
        %1180 = vmatprep.subr.mxu0 0.0
        %1181 = vmatpush1.xpose.msra.mxu0 %v1178
        %1182 = vmatprep.subr.mxu0 0.0
        %1183 = vmatpush1.xpose.msra.mxu0 0.0
        %1184 = vmatprep.subr.mxu0 0.0
        %1185 = vmatpush1.xpose.msra.mxu0 0.0
        %1186 = vmatprep.subr.mxu0 0.0
        %1187 = vmatpush1.xpose.msra.mxu0 0.0
        %1188 = vmatprep.subr.mxu0 0.0
        %1189 = vmatpush1.xpose.msra.mxu0 0.0
        %1190 = vmatprep.subr.mxu0 0.0
        %1191 = vmatpush1.xpose.msra.mxu0 0.0
        %1192 = vmatprep.subr.mxu0 0.0
        %1193 = vmatpush1.xpose.msra.mxu0 0.0
        %1194 = vmatprep.subr.mxu0 0.0
        %1195 = vmatpush1.xpose.msra.mxu0 0.0
        %1196 = vmatprep.subr.mxu0 0.0
        %1197 = vmatpush1.xpose.msra.mxu0 0.0
        %1198 = vmatprep.subr.mxu0 0.0
        %1199 = vmatpush1.xpose.msra.mxu0 0.0
        %1200 = vmatprep.subr.mxu0 0.0
        %1201 = vmatpush1.xpose.msra.mxu0 0.0
        %1202 = vmatprep.subr.mxu0 0.0
        %1203 = vmatpush1.xpose.msra.mxu0 0.0
        %1204 = vmatprep.subr.mxu0 0.0
        %1205 = vmatpush1.xpose.msra.mxu0 0.0
        %1206 = vmatprep.subr.mxu0 0.0
        %1207 = vmatpush1.xpose.msra.mxu0 0.0
        %1208 = vmatprep.subr.mxu0 0.0
        %1209 = vmatpush1.xpose.msra.mxu0 0.0
        %1210 = vmatprep.subr.mxu0 0.0
        %1211 = vmatpush1.xpose.msra.mxu0 0.0
        %1212 = vmatprep.subr.mxu0 0.0
        %1213 = vmatpush1.xpose.msra.mxu0 0.0
        %1214 = vmatprep.subr.mxu0 0.0
        %1215 = vmatpush1.xpose.msra.mxu0 0.0
        %1216 = vmatprep.subr.mxu0 0.0
        %1217 = vmatpush1.xpose.msra.mxu0 0.0
        %1218 = vmatprep.subr.mxu0 0.0
        %1219 = vmatpush1.xpose.msra.mxu0 0.0
        %1220 = vmatprep.subr.mxu0 0.0
        %1221 = vmatpush1.xpose.msra.mxu0 0.0
        %1222 = vmatprep.subr.mxu0 0.0
        %1223 = vmatpush1.xpose.msra.mxu0 0.0
        %1224 = vmatprep.subr.mxu0 0.0
        %1225 = vmatpush1.xpose.msra.mxu0 0.0
        %1226 = vmatprep.subr.mxu0 0.0
        %1227 = vmatpush1.xpose.msra.mxu0 0.0
        %1228 = vmatprep.subr.mxu0 0.0
        %1229 = vmatpush1.xpose.msra.mxu0 0.0
        %1230 = vmatprep.subr.mxu0 0.0
        %1231 = vmatpush1.xpose.msra.mxu0 0.0
        %1232 = vmatprep.subr.mxu0 0.0
        %1233 = vmatpush1.xpose.msra.mxu0 0.0
        %1234 = vmatprep.subr.mxu0 0.0
        %1235 = vmatpush1.xpose.msra.mxu0 0.0
        %1236 = vmatprep.subr.mxu0 0.0
        %1237 = vmatpush1.xpose.msra.mxu0 0.0
        %1238 = vmatprep.subr.mxu0 0.0
        %1239 = vmatpush1.xpose.msra.mxu0 0.0
        %1240 = vmatprep.subr.mxu0 0.0
        %1241 = vmatpush1.xpose.msra.mxu0 0.0
        %1242 = vmatprep.subr.mxu0 0.0
        %1243 = vmatpush1.xpose.msra.mxu0 0.0
        %1244 = vmatprep.mubr.f32.mxu0 0.0
        %1245 = vmatmul.mubr.f32.gmra.mrb[0].mxu0 %v1176
        %v1246 = vpop.f32.mrb[0].mxu0
        %v1247 = vadd.f32 0.0, %v1246
        %v1248 = vpop.f32.mrb[0].mxu0
        %1249 = vdwg.mxu0
        %v1250 = vmul.f32 %v1247, 0.35355338
        %v1251 = vadd.f32 %v1250, %v519
        %v1252 = vsel %vm693, %v1251, -inf
        %1253 = vmax.xlane.f32.xlu0 %v1252
        %v1254 = vpop.xlane.xlu0 %1253
        %v1255 = vsub.f32 %v1251, %v1254
        %v1256 = vmul.f32 %v1255, 1.442695
        %v1257 = vpow.pop %v1256
        %v1258 = vsel %vm693, %v1257, 0.0
        %1259 = vadd.xlane.f32.xlu0 %v1258
        %v1260 = vpop.xlane.xlu0 %1259
        %v1261 = vrcp.pop %v1260
        %v1262 = vmul.f32 %v1257, %v1261
        %1263 = vrot.lane.b32.xlu0 %v686, 80
        %v1264 = vpop.permute.xlu0 %1263
        %v1267 = vsel %vm693, %v1262, 0
        %1269 = vmatprep.subr.mxu0 0.0
        %1270 = vmatpush1.msra.mxu0 %v1264
        %1271 = vmatprep.subr.mxu0 0.0
        %1272 = vmatpush1.msra.mxu0 0.0
        %1273 = vmatprep.subr.mxu0 0.0
        %1274 = vmatpush1.msra.mxu0 0.0
        %1275 = vmatprep.subr.mxu0 0.0
        %1276 = vmatpush1.msra.mxu0 0.0
        %1277 = vmatprep.subr.mxu0 0.0
        %1278 = vmatpush1.msra.mxu0 0.0
        %1279 = vmatprep.subr.mxu0 0.0
        %1280 = vmatpush1.msra.mxu0 0.0
        %1281 = vmatprep.subr.mxu0 0.0
        %1282 = vmatpush1.msra.mxu0 0.0
        %1283 = vmatprep.subr.mxu0 0.0
        %1284 = vmatpush1.msra.mxu0 0.0
        %1285 = vmatprep.subr.mxu0 0.0
        %1286 = vmatpush1.msra.mxu0 0.0
        %1287 = vmatprep.subr.mxu0 0.0
        %1288 = vmatpush1.msra.mxu0 0.0
        %1289 = vmatprep.subr.mxu0 0.0
        %1290 = vmatpush1.msra.mxu0 0.0
        %1291 = vmatprep.subr.mxu0 0.0
        %1292 = vmatpush1.msra.mxu0 0.0
        %1293 = vmatprep.subr.mxu0 0.0
        %1294 = vmatpush1.msra.mxu0 0.0
        %1295 = vmatprep.subr.mxu0 0.0
        %1296 = vmatpush1.msra.mxu0 0.0
        %1297 = vmatprep.subr.mxu0 0.0
        %1298 = vmatpush1.msra.mxu0 0.0
        %1299 = vmatprep.subr.mxu0 0.0
        %1300 = vmatpush1.msra.mxu0 0.0
        %1301 = vmatprep.subr.mxu0 0.0
        %1302 = vmatpush1.msra.mxu0 0.0
        %1303 = vmatprep.subr.mxu0 0.0
        %1304 = vmatpush1.msra.mxu0 0.0
        %1305 = vmatprep.subr.mxu0 0.0
        %1306 = vmatpush1.msra.mxu0 0.0
        %1307 = vmatprep.subr.mxu0 0.0
        %1308 = vmatpush1.msra.mxu0 0.0
        %1309 = vmatprep.subr.mxu0 0.0
        %1310 = vmatpush1.msra.mxu0 0.0
        %1311 = vmatprep.subr.mxu0 0.0
        %1312 = vmatpush1.msra.mxu0 0.0
        %1313 = vmatprep.subr.mxu0 0.0
        %1314 = vmatpush1.msra.mxu0 0.0
        %1315 = vmatprep.subr.mxu0 0.0
        %1316 = vmatpush1.msra.mxu0 0.0
        %1317 = vmatprep.subr.mxu0 0.0
        %1318 = vmatpush1.msra.mxu0 0.0
        %1319 = vmatprep.subr.mxu0 0.0
        %1320 = vmatpush1.msra.mxu0 0.0
        %1321 = vmatprep.subr.mxu0 0.0
        %1322 = vmatpush1.msra.mxu0 0.0
        %1323 = vmatprep.subr.mxu0 0.0
        %1324 = vmatpush1.msra.mxu0 0.0
        %1325 = vmatprep.subr.mxu0 0.0
        %1326 = vmatpush1.msra.mxu0 0.0
        %1327 = vmatprep.subr.mxu0 0.0
        %1328 = vmatpush1.msra.mxu0 0.0
        %1329 = vmatprep.subr.mxu0 0.0
        %1330 = vmatpush1.msra.mxu0 0.0
        %1331 = vmatprep.subr.mxu0 0.0
        %1332 = vmatpush1.msra.mxu0 0.0
        %1333 = vmatprep.mubr.f32.mxu0 0.0
        %1334 = vmatmul.mubr.f32.gmra.mrb[0].mxu0 %v1267
        %v1335 = vpop.f32.mrb[0].mxu0
        %v1336 = vadd.f32 0.0, %v1335
        %v1337 = vpop.f32.mrb[0].mxu0
        %1338 = vdwg.mxu0
        %v1340 = vsel %vm693, %v1336, 0
        %1342 = vmatprep.subr.mxu0 0.0
        %1343 = vmatpush1.msra.mxu0 %v691
        %1344 = vmatprep.subr.mxu0 0.0
        %1345 = vmatpush1.msra.mxu0 0.0
        %1346 = vmatprep.subr.mxu0 0.0
        %1347 = vmatpush1.msra.mxu0 0.0
        %1348 = vmatprep.subr.mxu0 0.0
        %1349 = vmatpush1.msra.mxu0 0.0
        %1350 = vmatprep.subr.mxu0 0.0
        %1351 = vmatpush1.msra.mxu0 0.0
        %1352 = vmatprep.subr.mxu0 0.0
        %1353 = vmatpush1.msra.mxu0 0.0
        %1354 = vmatprep.subr.mxu0 0.0
        %1355 = vmatpush1.msra.mxu0 0.0
        %1356 = vmatprep.subr.mxu0 0.0
        %1357 = vmatpush1.msra.mxu0 0.0
        %1358 = vmatprep.subr.mxu0 0.0
        %1359 = vmatpush1.msra.mxu0 0.0
        %1360 = vmatprep.subr.mxu0 0.0
        %1361 = vmatpush1.msra.mxu0 0.0
        %1362 = vmatprep.subr.mxu0 0.0
        %1363 = vmatpush1.msra.mxu0 0.0
        %1364 = vmatprep.subr.mxu0 0.0
        %1365 = vmatpush1.msra.mxu0 0.0
        %1366 = vmatprep.subr.mxu0 0.0
        %1367 = vmatpush1.msra.mxu0 0.0
        %1368 = vmatprep.subr.mxu0 0.0
        %1369 = vmatpush1.msra.mxu0 0.0
        %1370 = vmatprep.subr.mxu0 0.0
        %1371 = vmatpush1.msra.mxu0 0.0
        %1372 = vmatprep.subr.mxu0 0.0
        %1373 = vmatpush1.msra.mxu0 0.0
        %1374 = vmatprep.subr.mxu0 0.0
        %1375 = vmatpush1.msra.mxu0 0.0
        %1376 = vmatprep.subr.mxu0 0.0
        %1377 = vmatpush1.msra.mxu0 0.0
        %1378 = vmatprep.subr.mxu0 0.0
        %1379 = vmatpush1.msra.mxu0 0.0
        %1380 = vmatprep.subr.mxu0 0.0
        %1381 = vmatpush1.msra.mxu0 0.0
        %1382 = vmatprep.subr.mxu0 0.0
        %1383 = vmatpush1.msra.mxu0 0.0
        %1384 = vmatprep.subr.mxu0 0.0
        %1385 = vmatpush1.msra.mxu0 0.0
        %1386 = vmatprep.subr.mxu0 0.0
        %1387 = vmatpush1.msra.mxu0 0.0
        %1388 = vmatprep.subr.mxu0 0.0
        %1389 = vmatpush1.msra.mxu0 0.0
        %1390 = vmatprep.subr.mxu0 0.0
        %1391 = vmatpush1.msra.mxu0 0.0
        %1392 = vmatprep.subr.mxu0 0.0
        %1393 = vmatpush1.msra.mxu0 0.0
        %1394 = vmatprep.subr.mxu0 0.0
        %1395 = vmatpush1.msra.mxu0 0.0
        %1396 = vmatprep.subr.mxu0 0.0
        %1397 = vmatpush1.msra.mxu0 0.0
        %1398 = vmatprep.subr.mxu0 0.0
        %1399 = vmatpush1.msra.mxu0 0.0
        %1400 = vmatprep.subr.mxu0 0.0
        %1401 = vmatpush1.msra.mxu0 0.0
        %1402 = vmatprep.subr.mxu0 0.0
        %1403 = vmatpush1.msra.mxu0 0.0
        %1404 = vmatprep.subr.mxu0 0.0
        %1405 = vmatpush1.msra.mxu0 0.0
        %1406 = vmatprep.mubr.f32.mxu0 0.0
        %1407 = vmatmul.mubr.f32.gmra.mrb[0].mxu0 %v1340
        %v1408 = vpop.f32.mrb[0].mxu0
        %v1409 = vadd.f32 0.0, %v1408
        %v1410 = vpop.f32.mrb[0].mxu0
        %1411 = vdwg.mxu0
        %v1412 = vadd.f32 %v1169, %v1409
        %1413 = vrot.lane.b32.xlu0 %v602, 104
        %v1414 = vpop.permute.xlu0 %1413
        %1415 = vrot.lane.b32.xlu0 %v686, 104
        %v1416 = vpop.permute.xlu0 %1415
        %v1417 = vsel %vm693, %v1414, 0
        %v1419 = vsel %vm693, %v1416, 0
        %1421 = vmatprep.subr.mxu0 0.0
        %1422 = vmatpush1.xpose.msra.mxu0 %v1419
        %1423 = vmatprep.subr.mxu0 0.0
        %1424 = vmatpush1.xpose.msra.mxu0 0.0
        %1425 = vmatprep.subr.mxu0 0.0
        %1426 = vmatpush1.xpose.msra.mxu0 0.0
        %1427 = vmatprep.subr.mxu0 0.0
        %1428 = vmatpush1.xpose.msra.mxu0 0.0
        %1429 = vmatprep.subr.mxu0 0.0
        %1430 = vmatpush1.xpose.msra.mxu0 0.0
        %1431 = vmatprep.subr.mxu0 0.0
        %1432 = vmatpush1.xpose.msra.mxu0 0.0
        %1433 = vmatprep.subr.mxu0 0.0
        %1434 = vmatpush1.xpose.msra.mxu0 0.0
        %1435 = vmatprep.subr.mxu0 0.0
        %1436 = vmatpush1.xpose.msra.mxu0 0.0
        %1437 = vmatprep.subr.mxu0 0.0
        %1438 = vmatpush1.xpose.msra.mxu0 0.0
        %1439 = vmatprep.subr.mxu0 0.0
        %1440 = vmatpush1.xpose.msra.mxu0 0.0
        %1441 = vmatprep.subr.mxu0 0.0
        %1442 = vmatpush1.xpose.msra.mxu0 0.0
        %1443 = vmatprep.subr.mxu0 0.0
        %1444 = vmatpush1.xpose.msra.mxu0 0.0
        %1445 = vmatprep.subr.mxu0 0.0
        %1446 = vmatpush1.xpose.msra.mxu0 0.0
        %1447 = vmatprep.subr.mxu0 0.0
        %1448 = vmatpush1.xpose.msra.mxu0 0.0
        %1449 = vmatprep.subr.mxu0 0.0
        %1450 = vmatpush1.xpose.msra.mxu0 0.0
        %1451 = vmatprep.subr.mxu0 0.0
        %1452 = vmatpush1.xpose.msra.mxu0 0.0
        %1453 = vmatprep.subr.mxu0 0.0
        %1454 = vmatpush1.xpose.msra.mxu0 0.0
        %1455 = vmatprep.subr.mxu0 0.0
        %1456 = vmatpush1.xpose.msra.mxu0 0.0
        %1457 = vmatprep.subr.mxu0 0.0
        %1458 = vmatpush1.xpose.msra.mxu0 0.0
        %1459 = vmatprep.subr.mxu0 0.0
        %1460 = vmatpush1.xpose.msra.mxu0 0.0
        %1461 = vmatprep.subr.mxu0 0.0
        %1462 = vmatpush1.xpose.msra.mxu0 0.0
        %1463 = vmatprep.subr.mxu0 0.0
        %1464 = vmatpush1.xpose.msra.mxu0 0.0
        %1465 = vmatprep.subr.mxu0 0.0
        %1466 = vmatpush1.xpose.msra.mxu0 0.0
        %1467 = vmatprep.subr.mxu0 0.0
        %1468 = vmatpush1.xpose.msra.mxu0 0.0
        %1469 = vmatprep.subr.mxu0 0.0
        %1470 = vmatpush1.xpose.msra.mxu0 0.0
        %1471 = vmatprep.subr.mxu0 0.0
        %1472 = vmatpush1.xpose.msra.mxu0 0.0
        %1473 = vmatprep.subr.mxu0 0.0
        %1474 = vmatpush1.xpose.msra.mxu0 0.0
        %1475 = vmatprep.subr.mxu0 0.0
        %1476 = vmatpush1.xpose.msra.mxu0 0.0
        %1477 = vmatprep.subr.mxu0 0.0
        %1478 = vmatpush1.xpose.msra.mxu0 0.0
        %1479 = vmatprep.subr.mxu0 0.0
        %1480 = vmatpush1.xpose.msra.mxu0 0.0
        %1481 = vmatprep.subr.mxu0 0.0
        %1482 = vmatpush1.xpose.msra.mxu0 0.0
        %1483 = vmatprep.subr.mxu0 0.0
        %1484 = vmatpush1.xpose.msra.mxu0 0.0
        %1485 = vmatprep.mubr.f32.mxu0 0.0
        %1486 = vmatmul.mubr.f32.gmra.mrb[0].mxu0 %v1417
        %v1487 = vpop.f32.mrb[0].mxu0
        %v1488 = vadd.f32 0.0, %v1487
        %v1489 = vpop.f32.mrb[0].mxu0
        %1490 = vdwg.mxu0
        %v1491 = vmul.f32 %v1488, 0.35355338
        %v1492 = vadd.f32 %v1491, %v519
        %v1493 = vsel %vm693, %v1492, -inf
        %1494 = vmax.xlane.f32.xlu0 %v1493
        %v1495 = vpop.xlane.xlu0 %1494
        %v1496 = vsub.f32 %v1492, %v1495
        %v1497 = vmul.f32 %v1496, 1.442695
        %v1498 = vpow.pop %v1497
        %v1499 = vsel %vm693, %v1498, 0.0
        %1500 = vadd.xlane.f32.xlu0 %v1499
        %v1501 = vpop.xlane.xlu0 %1500
        %v1502 = vrcp.pop %v1501
        %v1503 = vmul.f32 %v1498, %v1502
        %1504 = vrot.lane.b32.xlu0 %v686, 72
        %v1505 = vpop.permute.xlu0 %1504
        %v1508 = vsel %vm693, %v1503, 0
        %1510 = vmatprep.subr.mxu0 0.0
        %1511 = vmatpush1.msra.mxu0 %v1505
        %1512 = vmatprep.subr.mxu0 0.0
        %1513 = vmatpush1.msra.mxu0 0.0
        %1514 = vmatprep.subr.mxu0 0.0
        %1515 = vmatpush1.msra.mxu0 0.0
        %1516 = vmatprep.subr.mxu0 0.0
        %1517 = vmatpush1.msra.mxu0 0.0
        %1518 = vmatprep.subr.mxu0 0.0
        %1519 = vmatpush1.msra.mxu0 0.0
        %1520 = vmatprep.subr.mxu0 0.0
        %1521 = vmatpush1.msra.mxu0 0.0
        %1522 = vmatprep.subr.mxu0 0.0
        %1523 = vmatpush1.msra.mxu0 0.0
        %1524 = vmatprep.subr.mxu0 0.0
        %1525 = vmatpush1.msra.mxu0 0.0
        %1526 = vmatprep.subr.mxu0 0.0
        %1527 = vmatpush1.msra.mxu0 0.0
        %1528 = vmatprep.subr.mxu0 0.0
        %1529 = vmatpush1.msra.mxu0 0.0
        %1530 = vmatprep.subr.mxu0 0.0
        %1531 = vmatpush1.msra.mxu0 0.0
        %1532 = vmatprep.subr.mxu0 0.0
        %1533 = vmatpush1.msra.mxu0 0.0
        %1534 = vmatprep.subr.mxu0 0.0
        %1535 = vmatpush1.msra.mxu0 0.0
        %1536 = vmatprep.subr.mxu0 0.0
        %1537 = vmatpush1.msra.mxu0 0.0
        %1538 = vmatprep.subr.mxu0 0.0
        %1539 = vmatpush1.msra.mxu0 0.0
        %1540 = vmatprep.subr.mxu0 0.0
        %1541 = vmatpush1.msra.mxu0 0.0
        %1542 = vmatprep.subr.mxu0 0.0
        %1543 = vmatpush1.msra.mxu0 0.0
        %1544 = vmatprep.subr.mxu0 0.0
        %1545 = vmatpush1.msra.mxu0 0.0
        %1546 = vmatprep.subr.mxu0 0.0
        %1547 = vmatpush1.msra.mxu0 0.0
        %1548 = vmatprep.subr.mxu0 0.0
        %1549 = vmatpush1.msra.mxu0 0.0
        %1550 = vmatprep.subr.mxu0 0.0
        %1551 = vmatpush1.msra.mxu0 0.0
        %1552 = vmatprep.subr.mxu0 0.0
        %1553 = vmatpush1.msra.mxu0 0.0
        %1554 = vmatprep.subr.mxu0 0.0
        %1555 = vmatpush1.msra.mxu0 0.0
        %1556 = vmatprep.subr.mxu0 0.0
        %1557 = vmatpush1.msra.mxu0 0.0
        %1558 = vmatprep.subr.mxu0 0.0
        %1559 = vmatpush1.msra.mxu0 0.0
        %1560 = vmatprep.subr.mxu0 0.0
        %1561 = vmatpush1.msra.mxu0 0.0
        %1562 = vmatprep.subr.mxu0 0.0
        %1563 = vmatpush1.msra.mxu0 0.0
        %1564 = vmatprep.subr.mxu0 0.0
        %1565 = vmatpush1.msra.mxu0 0.0
        %1566 = vmatprep.subr.mxu0 0.0
        %1567 = vmatpush1.msra.mxu0 0.0
        %1568 = vmatprep.subr.mxu0 0.0
        %1569 = vmatpush1.msra.mxu0 0.0
        %1570 = vmatprep.subr.mxu0 0.0
        %1571 = vmatpush1.msra.mxu0 0.0
        %1572 = vmatprep.subr.mxu0 0.0
        %1573 = vmatpush1.msra.mxu0 0.0
        %1574 = vmatprep.mubr.f32.mxu0 0.0
        %1575 = vmatmul.mubr.f32.gmra.mrb[0].mxu0 %v1508
        %v1576 = vpop.f32.mrb[0].mxu0
        %v1577 = vadd.f32 0.0, %v1576
        %v1578 = vpop.f32.mrb[0].mxu0
        %1579 = vdwg.mxu0
        %v1581 = vsel %vm693, %v1577, 0
        %1583 = vmatprep.subr.mxu0 0.0
        %1584 = vmatpush1.msra.mxu0 %v692
        %1585 = vmatprep.subr.mxu0 0.0
        %1586 = vmatpush1.msra.mxu0 0.0
        %1587 = vmatprep.subr.mxu0 0.0
        %1588 = vmatpush1.msra.mxu0 0.0
        %1589 = vmatprep.subr.mxu0 0.0
        %1590 = vmatpush1.msra.mxu0 0.0
        %1591 = vmatprep.subr.mxu0 0.0
        %1592 = vmatpush1.msra.mxu0 0.0
        %1593 = vmatprep.subr.mxu0 0.0
        %1594 = vmatpush1.msra.mxu0 0.0
        %1595 = vmatprep.subr.mxu0 0.0
        %1596 = vmatpush1.msra.mxu0 0.0
        %1597 = vmatprep.subr.mxu0 0.0
        %1598 = vmatpush1.msra.mxu0 0.0
        %1599 = vmatprep.subr.mxu0 0.0
        %1600 = vmatpush1.msra.mxu0 0.0
        %1601 = vmatprep.subr.mxu0 0.0
        %1602 = vmatpush1.msra.mxu0 0.0
        %1603 = vmatprep.subr.mxu0 0.0
        %1604 = vmatpush1.msra.mxu0 0.0
        %1605 = vmatprep.subr.mxu0 0.0
        %1606 = vmatpush1.msra.mxu0 0.0
        %1607 = vmatprep.subr.mxu0 0.0
        %1608 = vmatpush1.msra.mxu0 0.0
        %1609 = vmatprep.subr.mxu0 0.0
        %1610 = vmatpush1.msra.mxu0 0.0
        %1611 = vmatprep.subr.mxu0 0.0
        %1612 = vmatpush1.msra.mxu0 0.0
        %1613 = vmatprep.subr.mxu0 0.0
        %1614 = vmatpush1.msra.mxu0 0.0
        %1615 = vmatprep.subr.mxu0 0.0
        %1616 = vmatpush1.msra.mxu0 0.0
        %1617 = vmatprep.subr.mxu0 0.0
        %1618 = vmatpush1.msra.mxu0 0.0
        %1619 = vmatprep.subr.mxu0 0.0
        %1620 = vmatpush1.msra.mxu0 0.0
        %1621 = vmatprep.subr.mxu0 0.0
        %1622 = vmatpush1.msra.mxu0 0.0
        %1623 = vmatprep.subr.mxu0 0.0
        %1624 = vmatpush1.msra.mxu0 0.0
        %1625 = vmatprep.subr.mxu0 0.0
        %1626 = vmatpush1.msra.mxu0 0.0
        %1627 = vmatprep.subr.mxu0 0.0
        %1628 = vmatpush1.msra.mxu0 0.0
        %1629 = vmatprep.subr.mxu0 0.0
        %1630 = vmatpush1.msra.mxu0 0.0
        %1631 = vmatprep.subr.mxu0 0.0
        %1632 = vmatpush1.msra.mxu0 0.0
        %1633 = vmatprep.subr.mxu0 0.0
        %1634 = vmatpush1.msra.mxu0 0.0
        %1635 = vmatprep.subr.mxu0 0.0
        %1636 = vmatpush1.msra.mxu0 0.0
        %1637 = vmatprep.subr.mxu0 0.0
        %1638 = vmatpush1.msra.mxu0 0.0
        %1639 = vmatprep.subr.mxu0 0.0
        %1640 = vmatpush1.msra.mxu0 0.0
        %1641 = vmatprep.subr.mxu0 0.0
        %1642 = vmatpush1.msra.mxu0 0.0
        %1643 = vmatprep.subr.mxu0 0.0
        %1644 = vmatpush1.msra.mxu0 0.0
        %1645 = vmatprep.subr.mxu0 0.0
        %1646 = vmatpush1.msra.mxu0 0.0
        %1647 = vmatprep.mubr.f32.mxu0 0.0
        %1648 = vmatmul.mubr.f32.gmra.mrb[0].mxu0 %v1581
        %v1649 = vpop.f32.mrb[0].mxu0
        %v1650 = vadd.f32 0.0, %v1649
        %v1651 = vpop.f32.mrb[0].mxu0
        %1652 = vdwg.mxu0
        %v1653 = vadd.f32 %v1412, %v1650
        %v1654 = vld [vmem:[%s8] sm:$0x1]
        %v1656 = vlaneseq
        %v1657 = vshrl.u32 %v1656, 7
        %v1658 = vsub.s32 0, %v1657
        %v1659 = vrot.slane %v1654, %v1658
        %v1661 = vadd.f32 %v1653, %v1659
        %v1662 = vadd.f32 %v1661, %v517
        %v1663 = vsel %vm531, %v1662, 0.0
        %1664 = vadd.xlane.f32.xlu0 %v1663
        %v1665 = vpop.xlane.xlu0 %1664
        %v1666 = vrcp.pop 32.0
        %v1667 = vmul.f32 %v1665, %v1666
        %v1668 = vsub.f32 %v1662, %v1667
        %v1669 = vmul.f32 %v1668, %v1668
        %v1670 = vsel %vm531, %v1669, 0.0
        %1671 = vadd.xlane.f32.xlu0 %v1670
        %v1672 = vpop.xlane.xlu0 %1671
        %v1673 = vmul.f32 %v1672, %v1666
        %v1674 = vadd.f32 %v1673, 1e-05
        %v1675 = vrsqrt.pop %v1674
        %v1676 = vmul.f32 %v1668, %v1675
        %v1677 = vld [vmem:[%s9] sm:$0x1]
        %v1679 = vlaneseq
        %v1680 = vshrl.u32 %v1679, 7
        %v1681 = vsub.s32 0, %v1680
        %v1682 = vrot.slane %v1677, %v1681
        %v1684 = vmul.f32 %v1676, %v1682
        %v1685 = vld [vmem:[%s10] sm:$0x1]
        %v1687 = vlaneseq
        %v1688 = vshrl.u32 %v1687, 7
        %v1689 = vsub.s32 0, %v1688
        %v1690 = vrot.slane %v1685, %v1689
        %v1692 = vadd.f32 %v1684, %v1690
        %1693 = vst.msk [vmem:[%s516] sm:$0xff] %vm531, %v1692
        %s1694 = sand.u32 %s287, 1
        %s1695 = scalar_lea.sflag [#allocation4], %s1694
        %s1696 = sand.u32 %s287, 1
        %s1697 = smul.addr %s1696, 8
        %s1698 = scalar_lea.vmem [#allocation13], %s1697
        // Predicated region
        $region89: #{tpu_custom_call.1} parent=63 // pred_check
          %p1699 = pneg %p297
        $region90: #{tpu_custom_call.1} parent=63 // pred_check_branch
          %1701 = sbr.rel (%p1699) target = $region92
        $region91: #{tpu_custom_call.1} parent=63 // pred_region
          %s1703 = ssub.s32 128, 128
          %1704 = vsyncadd %s1695, %s1703
          %s1705 = smul.addr %s33, 128
          %s1706 = scalar_lea.hbm %s11, %s1705
          %s1708 = sshll.u32 %s1698, 4
          %s1709 = int_to_ptr.vmem [resolvable:$true] %s1708
          %1711 = dma.vmem_to_hbm [thread:$0]  %s1709, 128, %s1706, %s1695
        $region92: #{tpu_custom_call.1} parent=63 // pred_fallthru
          _
      $region64: #{tpu_custom_call.1} parent=5 // pred_fallthru
        _
      %p1712 = scmp.le.s32.totalorder 2, %s28
      // Predicated region
      $region93: #{tpu_custom_call.1} parent=5 // pred_check
        %p1713 = pneg %p1712
      $region94: #{tpu_custom_call.1} parent=5 // pred_check_branch
        %1715 = sbr.rel (%p1713) target = $region96
      $region95: #{tpu_custom_call.1} parent=5 // pred_region
        %s1716 = ssub.s32 %s28, 2
        // Predicated region
        $region97: #{tpu_custom_call.1} parent=95 // pred_check
          %p1717 = pneg %p303
        $region98: #{tpu_custom_call.1} parent=95 // pred_check_branch
          %1719 = sbr.rel (%p1717) target = $region100
        $region99: #{tpu_custom_call.1} parent=95 // pred_region
          %s1720 = sand.u32 %s288, 1
          %s1721 = scalar_lea.sflag [#allocation4], %s1720
          %s1722 = sand.u32 %s288, 1
          %s1723 = smul.addr %s1722, 8
          %s1724 = scalar_lea.vmem [#allocation13], %s1723
          %1725 = dma.done %s1721, 128
        $region100: #{tpu_custom_call.1} parent=95 // pred_fallthru
          _
      $region96: #{tpu_custom_call.1} parent=5 // pred_fallthru
        _
    $region6: #{tpu_custom_call.1} parent=1 // loop_footer
      %s32 = sadd.s32 1, %s28
    $region7: #{tpu_custom_call.1} parent=1 // loop_footer_branch
      %27 = sbr.rel target = $region3
    $region8: #{tpu_custom_call.1} parent=1 // loop_exit
      _
    %1726 = vsyncpa [#allocation3], 1
    %s1727 = scalar_lea.sflag [#allocation3], 1
    %1728 = vsyncpa %s1727, 1
    %1729 = vsyncpa [#allocation6], 1
    %s1730 = scalar_lea.sflag [#allocation6], 1
    %1731 = vsyncpa %s1730, 1
    %1732 = vsyncpa [#allocation9], 1
    %1733 = vsyncpa [#allocation12], 1
    %1734 = vsyncpa [#allocation4], 1
    %s1735 = scalar_lea.sflag [#allocation4], 1
    %1736 = vsyncpa %s1735, 1

</llo_original>
